<compile_context>
chip_gen: v7x
topology: tpu7x:2x2x1
jax: 0.10.0
libtpu: 0.0.40
codegen_flags: <defaults>
</compile_context>

<pallas_src>
import jax
import jax.numpy as jnp
from jax.experimental import pallas as pl
from jax.experimental.pallas import tpu as pltpu

DIM = 64                        # C  (module `dim`)
EXPANSION = 2
INNER = DIM * EXPANSION         # 128 -> lane-dense intermediate
KERNEL_SIZE = 31                # module default
LN_EPS = 1e-5
BN_EPS = 1e-5


def conformer_conv_kernel(x_ref, w1_ref, b1_ref, wdw_ref, bdw_ref,
                          w2_ref, b2_ref, out_ref):
    """One batch tile per grid step.

    x_ref   : (Bt, N, C)       input tokens
    w1_ref  : (C, 2*inner)     pointwise conv #1 weight (LN affine folded in)
    b1_ref  : (1, 2*inner)     pointwise conv #1 bias   (LN beta folded in)
    wdw_ref : (K, inner)       depthwise conv weight    (BN scale folded in)
    bdw_ref : (1, inner)       depthwise conv bias      (BN shift folded in)
    w2_ref  : (inner, C)       pointwise conv #2 weight (in x out)
    b2_ref  : (1, C)           pointwise conv #2 bias
    out_ref : (Bt, N, C)       output tokens
    """
    x = x_ref[...].astype(jnp.float32)                     # (Bt, N, C)
    Bt, N, C = x.shape
    inner = w2_ref.shape[0]
    K = wdw_ref.shape[0]
    pad_l = K // 2
    pad_r = pad_l - (K + 1) % 2                            # calc_same_padding

    # ---------------- LayerNorm (normalize only; affine folded into w1/b1) ---
    mu = jnp.mean(x, axis=-1, keepdims=True)
    var = jnp.mean((x - mu) ** 2, axis=-1, keepdims=True)
    xn = (x - mu) * jax.lax.rsqrt(var + LN_EPS)

    # ---------------- pointwise conv (C -> 2*inner) + GLU --------------------
    y1 = jnp.dot(xn.reshape(Bt * N, C), w1_ref[...],
                 preferred_element_type=jnp.float32) + b1_ref[...]
    out_h = y1[:, :inner]
    gate = y1[:, inner:]
    g = (out_h * jax.nn.sigmoid(gate)).reshape(Bt, N, inner)

    # ---------------- depthwise conv along tokens ("same" padding) -----------
    zl = jnp.zeros((Bt, pad_l, inner), jnp.float32)
    zr = jnp.zeros((Bt, pad_r, inner), jnp.float32)
    gp = jnp.concatenate([zl, g, zr], axis=1)              # (Bt, N+K-1, inner)
    wdw = wdw_ref[...]                                     # (K, inner)
    acc = jnp.zeros((Bt, N, inner), jnp.float32)
    for k in range(K):                                     # static unroll (31 taps)
        wk = wdw[k:k + 1, :].reshape(1, 1, inner)
        acc = acc + gp[:, k:k + N, :] * wk
    h = acc + bdw_ref[...].reshape(1, 1, inner)

    # ---------------- (BatchNorm already folded) + Swish ---------------------
    # TODO(synk): BatchNorm1d is implemented in eval mode (running stats);
    # training-mode batch statistics would need a cross-grid reduction.
    h = h * jax.nn.sigmoid(h)                              # Swish

    # ---------------- pointwise conv (inner -> C) ----------------------------
    y = jnp.dot(h.reshape(Bt * N, inner), w2_ref[...],
                preferred_element_type=jnp.float32) + b2_ref[...]
    out_ref[...] = y.reshape(Bt, N, C).astype(out_ref.dtype)


def conformer_conv_forward(x, params, *, block_b=None):
    """x: (B, N, C) float32 -> (B, N, C) float32."""
    B, N, C = x.shape
    inner = params["w2"].shape[0]
    K = params["w_dw"].shape[0]

    if block_b is None:
        # Budget the batch tile against a modest VMEM target (a few MiB of live
        # activations per step) so it is safe on v7x's 64 MiB as well.
        per_b = 4 * (N * (2 * C + 4 * inner) + (N + K) * inner)
        block_b = max(1, min(B, (4 << 20) // max(per_b, 1)))
        while B % block_b:
            block_b -= 1
    assert B % block_b == 0, "block_b must divide B"
    grid = (B // block_b,)

    # Fold LayerNorm's affine (gamma, beta) into the first pointwise conv.
    w1_f = params["ln_g"].reshape(C, 1) * params["w1"]           # (C, 2*inner)
    b1_f = params["ln_b"] @ params["w1"] + params["b1"]          # (1, 2*inner)

    # Fold eval-mode BatchNorm into the depthwise conv weight / bias.
    bn_scale = params["bn_g"] / jnp.sqrt(params["bn_rv"] + BN_EPS)   # (1, inner)
    bn_shift = params["bn_b"] - params["bn_rm"] * bn_scale           # (1, inner)
    wdw_f = params["w_dw"] * bn_scale                                # (K, inner)
    bdw_f = params["b_dw"] * bn_scale + bn_shift                     # (1, inner)

    const2 = lambda b: (0, 0)
    in_specs = [
        pl.BlockSpec((block_b, N, C), lambda b: (b, 0, 0)),   # x (batch tiled)
        pl.BlockSpec((C, 2 * inner), const2),                 # w1 (LN folded)
        pl.BlockSpec((1, 2 * inner), const2),                 # b1 (LN folded)
        pl.BlockSpec((K, inner), const2),                     # depthwise weight (BN folded)
        pl.BlockSpec((1, inner), const2),                     # depthwise bias   (BN folded)
        pl.BlockSpec((inner, C), const2),                     # w2
        pl.BlockSpec((1, C), const2),                         # b2
    ]
    out_specs = pl.BlockSpec((block_b, N, C), lambda b: (b, 0, 0))

    return pl.pallas_call(
        conformer_conv_kernel,
        out_shape=jax.ShapeDtypeStruct((B, N, C), jnp.float32),
        grid=grid,
        in_specs=in_specs,
        out_specs=out_specs,
        compiler_params=pltpu.CompilerParams(
            dimension_semantics=("parallel",)),
    )(x, w1_f, b1_f, wdw_f, bdw_f, params["w2"], params["b2"])


# ---------------- pure-JAX reference (mirrors the PyTorch forward) ----------
def conformer_conv_reference(x, params):
    B, N, C = x.shape
    inner = params["w2"].shape[0]
    K = params["w_dw"].shape[0]
    pad_l = K // 2
    pad_r = pad_l - (K + 1) % 2

    mu = x.mean(-1, keepdims=True)
    var = ((x - mu) ** 2).mean(-1, keepdims=True)
    xn = (x - mu) / jnp.sqrt(var + LN_EPS) * params["ln_g"] + params["ln_b"]

    y1 = xn @ params["w1"] + params["b1"]                    # (B, N, 2*inner)
    out_h, gate = y1[..., :inner], y1[..., inner:]
    g = out_h * jax.nn.sigmoid(gate)                         # GLU

    gp = jnp.pad(g, ((0, 0), (pad_l, pad_r), (0, 0)))
    acc = jnp.zeros_like(g)
    for k in range(K):
        acc = acc + gp[:, k:k + N, :] * params["w_dw"][k][None, None, :]
    acc = acc + params["b_dw"][None]

    h = (acc - params["bn_rm"]) / jnp.sqrt(params["bn_rv"] + BN_EPS)
    h = h * params["bn_g"] + params["bn_b"]
    h = h * jax.nn.sigmoid(h)                                # Swish

    return h @ params["w2"] + params["b2"]


def init_params(key, dim=DIM, inner=INNER, kernel_size=KERNEL_SIZE):
    ks = jax.random.split(key, 10)
    return {
        "ln_g": jnp.ones((1, dim), jnp.float32)
                + 0.1 * jax.random.normal(ks[0], (1, dim), jnp.float32),
        "ln_b": 0.1 * jax.random.normal(ks[1], (1, dim), jnp.float32),
        "w1":   0.1 * jax.random.normal(ks[2], (dim, 2 * inner), jnp.float32),
        "b1":   0.1 * jax.random.normal(ks[3], (1, 2 * inner), jnp.float32),
        "w_dw": 0.1 * jax.random.normal(ks[4], (kernel_size, inner), jnp.float32),
        "b_dw": 0.1 * jax.random.normal(ks[5], (1, inner), jnp.float32),
        "bn_g": jnp.ones((1, inner), jnp.float32),
        "bn_b": jnp.zeros((1, inner), jnp.float32),
        "bn_rm": 0.1 * jax.random.normal(ks[6], (1, inner), jnp.float32),
        "bn_rv": jnp.ones((1, inner), jnp.float32)
                 + 0.1 * jnp.abs(jax.random.normal(ks[7], (1, inner), jnp.float32)),
        "w2":   0.1 * jax.random.normal(ks[8], (inner, dim), jnp.float32),
        "b2":   0.1 * jax.random.normal(ks[9], (1, dim), jnp.float32),
    }


if __name__ == "__main__":
    key = jax.random.PRNGKey(0)
    kx, kp = jax.random.split(key)
    B, N = 8, 16                                  # batch=8, seq=16, dim=64
    x = jax.random.normal(kx, (B, N, DIM), jnp.float32)
    params = init_params(kp)

    out = conformer_conv_forward(x, params, block_b=4)   # grid=(2,), "parallel"
    out = jax.block_until_ready(out)

    ref = conformer_conv_reference(x, params)
    assert out.shape == (B, N, DIM)
    assert jnp.allclose(out, ref, atol=1e-4, rtol=1e-3), "output mismatch"

    print("KERNEL_OK")
</pallas_src>

<mosaic_0001>
module attributes {stable_mosaic.version = 11 : i64} {
  func.func @conformer_conv_kernel(%arg0: i32, %arg1: memref<4x16x64xf32, #tpu.memory_space<vmem>>, %arg2: memref<64x256xf32, #tpu.memory_space<vmem>>, %arg3: memref<1x256xf32, #tpu.memory_space<vmem>>, %arg4: memref<31x128xf32, #tpu.memory_space<vmem>>, %arg5: memref<1x128xf32, #tpu.memory_space<vmem>>, %arg6: memref<128x64xf32, #tpu.memory_space<vmem>>, %arg7: memref<1x64xf32, #tpu.memory_space<vmem>>, %arg8: memref<4x16x64xf32, #tpu.memory_space<vmem>>) attributes {dimension_semantics = [#tpu.dimension_semantics<parallel>], iteration_bounds = array<i64: 2>, scalar_prefetch = 0 : i64, scratch_operands = 0 : i64, tpu.core_type = #tpu.core_type<tc>, window_params = [{transform_indices = @transform_0, window_bounds = array<i64: 4, 16, 64>}, {pipeline_mode = #tpu.pipeline_mode<synchronous>, transform_indices = @transform_1, window_bounds = array<i64: 64, 256>}, {pipeline_mode = #tpu.pipeline_mode<synchronous>, transform_indices = @transform_2, window_bounds = array<i64: 1, 256>}, {pipeline_mode = #tpu.pipeline_mode<synchronous>, transform_indices = @transform_3, window_bounds = array<i64: 31, 128>}, {pipeline_mode = #tpu.pipeline_mode<synchronous>, transform_indices = @transform_4, window_bounds = array<i64: 1, 128>}, {pipeline_mode = #tpu.pipeline_mode<synchronous>, transform_indices = @transform_5, window_bounds = array<i64: 128, 64>}, {pipeline_mode = #tpu.pipeline_mode<synchronous>, transform_indices = @transform_6, window_bounds = array<i64: 1, 64>}, {transform_indices = @transform_7, window_bounds = array<i64: 4, 16, 64>}]} {
    %c0 = arith.constant 0 : index
    %c0_0 = arith.constant 0 : index
    %c0_1 = arith.constant 0 : index
    %0 = vector.load %arg1[%c0, %c0_0, %c0_1] : memref<4x16x64xf32, #tpu.memory_space<vmem>>, vector<4x16x64xf32>
    %cst = arith.constant dense<0.000000e+00> : vector<4x16xf32>
    %1 = vector.multi_reduction <add>, %0, %cst [2] : vector<4x16x64xf32> to vector<4x16xf32>
    %2 = vector.shape_cast %1 : vector<4x16xf32> to vector<4x16x1xf32>
    %cst_2 = arith.constant 6.400000e+01 : f32
    %3 = vector.broadcast %cst_2 : f32 to vector<4x16x1xf32>
    %4 = arith.divf %2, %3 : vector<4x16x1xf32>
    %5 = vector.broadcast %4 : vector<4x16x1xf32> to vector<4x16x64xf32>
    %6 = arith.subf %0, %5 : vector<4x16x64xf32>
    %7 = arith.mulf %6, %6 : vector<4x16x64xf32>
    %cst_3 = arith.constant dense<0.000000e+00> : vector<4x16xf32>
    %8 = vector.multi_reduction <add>, %7, %cst_3 [2] : vector<4x16x64xf32> to vector<4x16xf32>
    %9 = vector.shape_cast %8 : vector<4x16xf32> to vector<4x16x1xf32>
    %cst_4 = arith.constant 6.400000e+01 : f32
    %10 = vector.broadcast %cst_4 : f32 to vector<4x16x1xf32>
    %11 = arith.divf %9, %10 : vector<4x16x1xf32>
    %12 = vector.broadcast %4 : vector<4x16x1xf32> to vector<4x16x64xf32>
    %13 = arith.subf %0, %12 : vector<4x16x64xf32>
    %cst_5 = arith.constant 9.99999974E-6 : f32
    %14 = vector.broadcast %cst_5 : f32 to vector<4x16x1xf32>
    %15 = arith.addf %11, %14 : vector<4x16x1xf32>
    %16 = math.rsqrt %15 : vector<4x16x1xf32>
    %17 = vector.broadcast %16 : vector<4x16x1xf32> to vector<4x16x64xf32>
    %18 = arith.mulf %13, %17 : vector<4x16x64xf32>
    %19 = vector.shape_cast %18 : vector<4x16x64xf32> to vector<64x64xf32>
    %c0_6 = arith.constant 0 : index
    %c0_7 = arith.constant 0 : index
    %20 = vector.load %arg2[%c0_6, %c0_7] : memref<64x256xf32, #tpu.memory_space<vmem>>, vector<64x256xf32>
    %cst_8 = arith.constant dense<0.000000e+00> : vector<64x256xf32>
    %21 = tpu.matmul %19, %20, %cst_8 {dimension_numbers = #tpu.dot_dimension_numbers<[1], [0], [0], [1], [0, 0, 1, 1], [], []>} : vector<64x64xf32>, vector<64x256xf32>, vector<64x256xf32> -> vector<64x256xf32>
    %c0_9 = arith.constant 0 : index
    %c0_10 = arith.constant 0 : index
    %22 = vector.load %arg3[%c0_9, %c0_10] : memref<1x256xf32, #tpu.memory_space<vmem>>, vector<1x256xf32>
    %23 = vector.broadcast %22 : vector<1x256xf32> to vector<64x256xf32>
    %24 = arith.addf %21, %23 : vector<64x256xf32>
    %25 = vector.extract_strided_slice %24 {offsets = [0, 0], sizes = [64, 128], strides = [1, 1]} : vector<64x256xf32> to vector<64x128xf32>
    %26 = vector.extract_strided_slice %24 {offsets = [0, 128], sizes = [64, 128], strides = [1, 1]} : vector<64x256xf32> to vector<64x128xf32>
    %27 = arith.negf %26 : vector<64x128xf32>
    %28 = math.exp %27 : vector<64x128xf32>
    %cst_11 = arith.constant 1.000000e+00 : f32
    %29 = vector.broadcast %cst_11 : f32 to vector<64x128xf32>
    %30 = arith.addf %29, %28 : vector<64x128xf32>
    %31 = arith.divf %29, %30 : vector<64x128xf32>
    %32 = arith.mulf %25, %31 : vector<64x128xf32>
    %33 = vector.shape_cast %32 : vector<64x128xf32> to vector<4x16x128xf32>
    %cst_12 = arith.constant 0.000000e+00 : f32
    %34 = vector.broadcast %cst_12 : f32 to vector<4x15x128xf32>
    %cst_13 = arith.constant 0.000000e+00 : f32
    %35 = vector.broadcast %cst_13 : f32 to vector<4x15x128xf32>
    %36 = tpu.concatenate %34, %33, %35 in 1 : vector<4x15x128xf32>, vector<4x16x128xf32>, vector<4x15x128xf32> -> vector<4x46x128xf32>
    %c0_14 = arith.constant 0 : index
    %c0_15 = arith.constant 0 : index
    %37 = vector.load %arg4[%c0_14, %c0_15] : memref<31x128xf32, #tpu.memory_space<vmem>>, vector<31x128xf32>
    %cst_16 = arith.constant 0.000000e+00 : f32
    %38 = vector.broadcast %cst_16 : f32 to vector<4x16x128xf32>
    %39 = vector.extract_strided_slice %37 {offsets = [0, 0], sizes = [1, 128], strides = [1, 1]} : vector<31x128xf32> to vector<1x128xf32>
    %40 = vector.shape_cast %39 : vector<1x128xf32> to vector<1x1x128xf32>
    %41 = vector.extract_strided_slice %36 {offsets = [0, 0, 0], sizes = [4, 16, 128], strides = [1, 1, 1]} : vector<4x46x128xf32> to vector<4x16x128xf32>
    %42 = vector.broadcast %40 : vector<1x1x128xf32> to vector<4x16x128xf32>
    %43 = arith.mulf %41, %42 : vector<4x16x128xf32>
    %44 = arith.addf %38, %43 : vector<4x16x128xf32>
    %45 = vector.extract_strided_slice %37 {offsets = [1, 0], sizes = [1, 128], strides = [1, 1]} : vector<31x128xf32> to vector<1x128xf32>
    %46 = vector.shape_cast %45 : vector<1x128xf32> to vector<1x1x128xf32>
    %47 = vector.extract_strided_slice %36 {offsets = [0, 1, 0], sizes = [4, 16, 128], strides = [1, 1, 1]} : vector<4x46x128xf32> to vector<4x16x128xf32>
    %48 = vector.broadcast %46 : vector<1x1x128xf32> to vector<4x16x128xf32>
    %49 = arith.mulf %47, %48 : vector<4x16x128xf32>
    %50 = arith.addf %44, %49 : vector<4x16x128xf32>
    %51 = vector.extract_strided_slice %37 {offsets = [2, 0], sizes = [1, 128], strides = [1, 1]} : vector<31x128xf32> to vector<1x128xf32>
    %52 = vector.shape_cast %51 : vector<1x128xf32> to vector<1x1x128xf32>
    %53 = vector.extract_strided_slice %36 {offsets = [0, 2, 0], sizes = [4, 16, 128], strides = [1, 1, 1]} : vector<4x46x128xf32> to vector<4x16x128xf32>
    %54 = vector.broadcast %52 : vector<1x1x128xf32> to vector<4x16x128xf32>
    %55 = arith.mulf %53, %54 : vector<4x16x128xf32>
    %56 = arith.addf %50, %55 : vector<4x16x128xf32>
    %57 = vector.extract_strided_slice %37 {offsets = [3, 0], sizes = [1, 128], strides = [1, 1]} : vector<31x128xf32> to vector<1x128xf32>
    %58 = vector.shape_cast %57 : vector<1x128xf32> to vector<1x1x128xf32>
    %59 = vector.extract_strided_slice %36 {offsets = [0, 3, 0], sizes = [4, 16, 128], strides = [1, 1, 1]} : vector<4x46x128xf32> to vector<4x16x128xf32>
    %60 = vector.broadcast %58 : vector<1x1x128xf32> to vector<4x16x128xf32>
    %61 = arith.mulf %59, %60 : vector<4x16x128xf32>
    %62 = arith.addf %56, %61 : vector<4x16x128xf32>
    %63 = vector.extract_strided_slice %37 {offsets = [4, 0], sizes = [1, 128], strides = [1, 1]} : vector<31x128xf32> to vector<1x128xf32>
    %64 = vector.shape_cast %63 : vector<1x128xf32> to vector<1x1x128xf32>
    %65 = vector.extract_strided_slice %36 {offsets = [0, 4, 0], sizes = [4, 16, 128], strides = [1, 1, 1]} : vector<4x46x128xf32> to vector<4x16x128xf32>
    %66 = vector.broadcast %64 : vector<1x1x128xf32> to vector<4x16x128xf32>
    %67 = arith.mulf %65, %66 : vector<4x16x128xf32>
    %68 = arith.addf %62, %67 : vector<4x16x128xf32>
    %69 = vector.extract_strided_slice %37 {offsets = [5, 0], sizes = [1, 128], strides = [1, 1]} : vector<31x128xf32> to vector<1x128xf32>
    %70 = vector.shape_cast %69 : vector<1x128xf32> to vector<1x1x128xf32>
    %71 = vector.extract_strided_slice %36 {offsets = [0, 5, 0], sizes = [4, 16, 128], strides = [1, 1, 1]} : vector<4x46x128xf32> to vector<4x16x128xf32>
    %72 = vector.broadcast %70 : vector<1x1x128xf32> to vector<4x16x128xf32>
    %73 = arith.mulf %71, %72 : vector<4x16x128xf32>
    %74 = arith.addf %68, %73 : vector<4x16x128xf32>
    %75 = vector.extract_strided_slice %37 {offsets = [6, 0], sizes = [1, 128], strides = [1, 1]} : vector<31x128xf32> to vector<1x128xf32>
    %76 = vector.shape_cast %75 : vector<1x128xf32> to vector<1x1x128xf32>
    %77 = vector.extract_strided_slice %36 {offsets = [0, 6, 0], sizes = [4, 16, 128], strides = [1, 1, 1]} : vector<4x46x128xf32> to vector<4x16x128xf32>
    %78 = vector.broadcast %76 : vector<1x1x128xf32> to vector<4x16x128xf32>
    %79 = arith.mulf %77, %78 : vector<4x16x128xf32>
    %80 = arith.addf %74, %79 : vector<4x16x128xf32>
    %81 = vector.extract_strided_slice %37 {offsets = [7, 0], sizes = [1, 128], strides = [1, 1]} : vector<31x128xf32> to vector<1x128xf32>
    %82 = vector.shape_cast %81 : vector<1x128xf32> to vector<1x1x128xf32>
    %83 = vector.extract_strided_slice %36 {offsets = [0, 7, 0], sizes = [4, 16, 128], strides = [1, 1, 1]} : vector<4x46x128xf32> to vector<4x16x128xf32>
    %84 = vector.broadcast %82 : vector<1x1x128xf32> to vector<4x16x128xf32>
    %85 = arith.mulf %83, %84 : vector<4x16x128xf32>
    %86 = arith.addf %80, %85 : vector<4x16x128xf32>
    %87 = vector.extract_strided_slice %37 {offsets = [8, 0], sizes = [1, 128], strides = [1, 1]} : vector<31x128xf32> to vector<1x128xf32>
    %88 = vector.shape_cast %87 : vector<1x128xf32> to vector<1x1x128xf32>
    %89 = vector.extract_strided_slice %36 {offsets = [0, 8, 0], sizes = [4, 16, 128], strides = [1, 1, 1]} : vector<4x46x128xf32> to vector<4x16x128xf32>
    %90 = vector.broadcast %88 : vector<1x1x128xf32> to vector<4x16x128xf32>
    %91 = arith.mulf %89, %90 : vector<4x16x128xf32>
    %92 = arith.addf %86, %91 : vector<4x16x128xf32>
    %93 = vector.extract_strided_slice %37 {offsets = [9, 0], sizes = [1, 128], strides = [1, 1]} : vector<31x128xf32> to vector<1x128xf32>
    %94 = vector.shape_cast %93 : vector<1x128xf32> to vector<1x1x128xf32>
    %95 = vector.extract_strided_slice %36 {offsets = [0, 9, 0], sizes = [4, 16, 128], strides = [1, 1, 1]} : vector<4x46x128xf32> to vector<4x16x128xf32>
    %96 = vector.broadcast %94 : vector<1x1x128xf32> to vector<4x16x128xf32>
    %97 = arith.mulf %95, %96 : vector<4x16x128xf32>
    %98 = arith.addf %92, %97 : vector<4x16x128xf32>
    %99 = vector.extract_strided_slice %37 {offsets = [10, 0], sizes = [1, 128], strides = [1, 1]} : vector<31x128xf32> to vector<1x128xf32>
    %100 = vector.shape_cast %99 : vector<1x128xf32> to vector<1x1x128xf32>
    %101 = vector.extract_strided_slice %36 {offsets = [0, 10, 0], sizes = [4, 16, 128], strides = [1, 1, 1]} : vector<4x46x128xf32> to vector<4x16x128xf32>
    %102 = vector.broadcast %100 : vector<1x1x128xf32> to vector<4x16x128xf32>
    %103 = arith.mulf %101, %102 : vector<4x16x128xf32>
    %104 = arith.addf %98, %103 : vector<4x16x128xf32>
    %105 = vector.extract_strided_slice %37 {offsets = [11, 0], sizes = [1, 128], strides = [1, 1]} : vector<31x128xf32> to vector<1x128xf32>
    %106 = vector.shape_cast %105 : vector<1x128xf32> to vector<1x1x128xf32>
    %107 = vector.extract_strided_slice %36 {offsets = [0, 11, 0], sizes = [4, 16, 128], strides = [1, 1, 1]} : vector<4x46x128xf32> to vector<4x16x128xf32>
    %108 = vector.broadcast %106 : vector<1x1x128xf32> to vector<4x16x128xf32>
    %109 = arith.mulf %107, %108 : vector<4x16x128xf32>
    %110 = arith.addf %104, %109 : vector<4x16x128xf32>
    %111 = vector.extract_strided_slice %37 {offsets = [12, 0], sizes = [1, 128], strides = [1, 1]} : vector<31x128xf32> to vector<1x128xf32>
    %112 = vector.shape_cast %111 : vector<1x128xf32> to vector<1x1x128xf32>
    %113 = vector.extract_strided_slice %36 {offsets = [0, 12, 0], sizes = [4, 16, 128], strides = [1, 1, 1]} : vector<4x46x128xf32> to vector<4x16x128xf32>
    %114 = vector.broadcast %112 : vector<1x1x128xf32> to vector<4x16x128xf32>
    %115 = arith.mulf %113, %114 : vector<4x16x128xf32>
    %116 = arith.addf %110, %115 : vector<4x16x128xf32>
    %117 = vector.extract_strided_slice %37 {offsets = [13, 0], sizes = [1, 128], strides = [1, 1]} : vector<31x128xf32> to vector<1x128xf32>
    %118 = vector.shape_cast %117 : vector<1x128xf32> to vector<1x1x128xf32>
    %119 = vector.extract_strided_slice %36 {offsets = [0, 13, 0], sizes = [4, 16, 128], strides = [1, 1, 1]} : vector<4x46x128xf32> to vector<4x16x128xf32>
    %120 = vector.broadcast %118 : vector<1x1x128xf32> to vector<4x16x128xf32>
    %121 = arith.mulf %119, %120 : vector<4x16x128xf32>
    %122 = arith.addf %116, %121 : vector<4x16x128xf32>
    %123 = vector.extract_strided_slice %37 {offsets = [14, 0], sizes = [1, 128], strides = [1, 1]} : vector<31x128xf32> to vector<1x128xf32>
    %124 = vector.shape_cast %123 : vector<1x128xf32> to vector<1x1x128xf32>
    %125 = vector.extract_strided_slice %36 {offsets = [0, 14, 0], sizes = [4, 16, 128], strides = [1, 1, 1]} : vector<4x46x128xf32> to vector<4x16x128xf32>
    %126 = vector.broadcast %124 : vector<1x1x128xf32> to vector<4x16x128xf32>
    %127 = arith.mulf %125, %126 : vector<4x16x128xf32>
    %128 = arith.addf %122, %127 : vector<4x16x128xf32>
    %129 = vector.extract_strided_slice %37 {offsets = [15, 0], sizes = [1, 128], strides = [1, 1]} : vector<31x128xf32> to vector<1x128xf32>
    %130 = vector.shape_cast %129 : vector<1x128xf32> to vector<1x1x128xf32>
    %131 = vector.extract_strided_slice %36 {offsets = [0, 15, 0], sizes = [4, 16, 128], strides = [1, 1, 1]} : vector<4x46x128xf32> to vector<4x16x128xf32>
    %132 = vector.broadcast %130 : vector<1x1x128xf32> to vector<4x16x128xf32>
    %133 = arith.mulf %131, %132 : vector<4x16x128xf32>
    %134 = arith.addf %128, %133 : vector<4x16x128xf32>
    %135 = vector.extract_strided_slice %37 {offsets = [16, 0], sizes = [1, 128], strides = [1, 1]} : vector<31x128xf32> to vector<1x128xf32>
    %136 = vector.shape_cast %135 : vector<1x128xf32> to vector<1x1x128xf32>
    %137 = vector.extract_strided_slice %36 {offsets = [0, 16, 0], sizes = [4, 16, 128], strides = [1, 1, 1]} : vector<4x46x128xf32> to vector<4x16x128xf32>
    %138 = vector.broadcast %136 : vector<1x1x128xf32> to vector<4x16x128xf32>
    %139 = arith.mulf %137, %138 : vector<4x16x128xf32>
    %140 = arith.addf %134, %139 : vector<4x16x128xf32>
    %141 = vector.extract_strided_slice %37 {offsets = [17, 0], sizes = [1, 128], strides = [1, 1]} : vector<31x128xf32> to vector<1x128xf32>
    %142 = vector.shape_cast %141 : vector<1x128xf32> to vector<1x1x128xf32>
    %143 = vector.extract_strided_slice %36 {offsets = [0, 17, 0], sizes = [4, 16, 128], strides = [1, 1, 1]} : vector<4x46x128xf32> to vector<4x16x128xf32>
    %144 = vector.broadcast %142 : vector<1x1x128xf32> to vector<4x16x128xf32>
    %145 = arith.mulf %143, %144 : vector<4x16x128xf32>
    %146 = arith.addf %140, %145 : vector<4x16x128xf32>
    %147 = vector.extract_strided_slice %37 {offsets = [18, 0], sizes = [1, 128], strides = [1, 1]} : vector<31x128xf32> to vector<1x128xf32>
    %148 = vector.shape_cast %147 : vector<1x128xf32> to vector<1x1x128xf32>
    %149 = vector.extract_strided_slice %36 {offsets = [0, 18, 0], sizes = [4, 16, 128], strides = [1, 1, 1]} : vector<4x46x128xf32> to vector<4x16x128xf32>
    %150 = vector.broadcast %148 : vector<1x1x128xf32> to vector<4x16x128xf32>
    %151 = arith.mulf %149, %150 : vector<4x16x128xf32>
    %152 = arith.addf %146, %151 : vector<4x16x128xf32>
    %153 = vector.extract_strided_slice %37 {offsets = [19, 0], sizes = [1, 128], strides = [1, 1]} : vector<31x128xf32> to vector<1x128xf32>
    %154 = vector.shape_cast %153 : vector<1x128xf32> to vector<1x1x128xf32>
    %155 = vector.extract_strided_slice %36 {offsets = [0, 19, 0], sizes = [4, 16, 128], strides = [1, 1, 1]} : vector<4x46x128xf32> to vector<4x16x128xf32>
    %156 = vector.broadcast %154 : vector<1x1x128xf32> to vector<4x16x128xf32>
    %157 = arith.mulf %155, %156 : vector<4x16x128xf32>
    %158 = arith.addf %152, %157 : vector<4x16x128xf32>
    %159 = vector.extract_strided_slice %37 {offsets = [20, 0], sizes = [1, 128], strides = [1, 1]} : vector<31x128xf32> to vector<1x128xf32>
    %160 = vector.shape_cast %159 : vector<1x128xf32> to vector<1x1x128xf32>
    %161 = vector.extract_strided_slice %36 {offsets = [0, 20, 0], sizes = [4, 16, 128], strides = [1, 1, 1]} : vector<4x46x128xf32> to vector<4x16x128xf32>
    %162 = vector.broadcast %160 : vector<1x1x128xf32> to vector<4x16x128xf32>
    %163 = arith.mulf %161, %162 : vector<4x16x128xf32>
    %164 = arith.addf %158, %163 : vector<4x16x128xf32>
    %165 = vector.extract_strided_slice %37 {offsets = [21, 0], sizes = [1, 128], strides = [1, 1]} : vector<31x128xf32> to vector<1x128xf32>
    %166 = vector.shape_cast %165 : vector<1x128xf32> to vector<1x1x128xf32>
    %167 = vector.extract_strided_slice %36 {offsets = [0, 21, 0], sizes = [4, 16, 128], strides = [1, 1, 1]} : vector<4x46x128xf32> to vector<4x16x128xf32>
    %168 = vector.broadcast %166 : vector<1x1x128xf32> to vector<4x16x128xf32>
    %169 = arith.mulf %167, %168 : vector<4x16x128xf32>
    %170 = arith.addf %164, %169 : vector<4x16x128xf32>
    %171 = vector.extract_strided_slice %37 {offsets = [22, 0], sizes = [1, 128], strides = [1, 1]} : vector<31x128xf32> to vector<1x128xf32>
    %172 = vector.shape_cast %171 : vector<1x128xf32> to vector<1x1x128xf32>
    %173 = vector.extract_strided_slice %36 {offsets = [0, 22, 0], sizes = [4, 16, 128], strides = [1, 1, 1]} : vector<4x46x128xf32> to vector<4x16x128xf32>
    %174 = vector.broadcast %172 : vector<1x1x128xf32> to vector<4x16x128xf32>
    %175 = arith.mulf %173, %174 : vector<4x16x128xf32>
    %176 = arith.addf %170, %175 : vector<4x16x128xf32>
    %177 = vector.extract_strided_slice %37 {offsets = [23, 0], sizes = [1, 128], strides = [1, 1]} : vector<31x128xf32> to vector<1x128xf32>
    %178 = vector.shape_cast %177 : vector<1x128xf32> to vector<1x1x128xf32>
    %179 = vector.extract_strided_slice %36 {offsets = [0, 23, 0], sizes = [4, 16, 128], strides = [1, 1, 1]} : vector<4x46x128xf32> to vector<4x16x128xf32>
    %180 = vector.broadcast %178 : vector<1x1x128xf32> to vector<4x16x128xf32>
    %181 = arith.mulf %179, %180 : vector<4x16x128xf32>
    %182 = arith.addf %176, %181 : vector<4x16x128xf32>
    %183 = vector.extract_strided_slice %37 {offsets = [24, 0], sizes = [1, 128], strides = [1, 1]} : vector<31x128xf32> to vector<1x128xf32>
    %184 = vector.shape_cast %183 : vector<1x128xf32> to vector<1x1x128xf32>
    %185 = vector.extract_strided_slice %36 {offsets = [0, 24, 0], sizes = [4, 16, 128], strides = [1, 1, 1]} : vector<4x46x128xf32> to vector<4x16x128xf32>
    %186 = vector.broadcast %184 : vector<1x1x128xf32> to vector<4x16x128xf32>
    %187 = arith.mulf %185, %186 : vector<4x16x128xf32>
    %188 = arith.addf %182, %187 : vector<4x16x128xf32>
    %189 = vector.extract_strided_slice %37 {offsets = [25, 0], sizes = [1, 128], strides = [1, 1]} : vector<31x128xf32> to vector<1x128xf32>
    %190 = vector.shape_cast %189 : vector<1x128xf32> to vector<1x1x128xf32>
    %191 = vector.extract_strided_slice %36 {offsets = [0, 25, 0], sizes = [4, 16, 128], strides = [1, 1, 1]} : vector<4x46x128xf32> to vector<4x16x128xf32>
    %192 = vector.broadcast %190 : vector<1x1x128xf32> to vector<4x16x128xf32>
    %193 = arith.mulf %191, %192 : vector<4x16x128xf32>
    %194 = arith.addf %188, %193 : vector<4x16x128xf32>
    %195 = vector.extract_strided_slice %37 {offsets = [26, 0], sizes = [1, 128], strides = [1, 1]} : vector<31x128xf32> to vector<1x128xf32>
    %196 = vector.shape_cast %195 : vector<1x128xf32> to vector<1x1x128xf32>
    %197 = vector.extract_strided_slice %36 {offsets = [0, 26, 0], sizes = [4, 16, 128], strides = [1, 1, 1]} : vector<4x46x128xf32> to vector<4x16x128xf32>
    %198 = vector.broadcast %196 : vector<1x1x128xf32> to vector<4x16x128xf32>
    %199 = arith.mulf %197, %198 : vector<4x16x128xf32>
    %200 = arith.addf %194, %199 : vector<4x16x128xf32>
    %201 = vector.extract_strided_slice %37 {offsets = [27, 0], sizes = [1, 128], strides = [1, 1]} : vector<31x128xf32> to vector<1x128xf32>
    %202 = vector.shape_cast %201 : vector<1x128xf32> to vector<1x1x128xf32>
    %203 = vector.extract_strided_slice %36 {offsets = [0, 27, 0], sizes = [4, 16, 128], strides = [1, 1, 1]} : vector<4x46x128xf32> to vector<4x16x128xf32>
    %204 = vector.broadcast %202 : vector<1x1x128xf32> to vector<4x16x128xf32>
    %205 = arith.mulf %203, %204 : vector<4x16x128xf32>
    %206 = arith.addf %200, %205 : vector<4x16x128xf32>
    %207 = vector.extract_strided_slice %37 {offsets = [28, 0], sizes = [1, 128], strides = [1, 1]} : vector<31x128xf32> to vector<1x128xf32>
    %208 = vector.shape_cast %207 : vector<1x128xf32> to vector<1x1x128xf32>
    %209 = vector.extract_strided_slice %36 {offsets = [0, 28, 0], sizes = [4, 16, 128], strides = [1, 1, 1]} : vector<4x46x128xf32> to vector<4x16x128xf32>
    %210 = vector.broadcast %208 : vector<1x1x128xf32> to vector<4x16x128xf32>
    %211 = arith.mulf %209, %210 : vector<4x16x128xf32>
    %212 = arith.addf %206, %211 : vector<4x16x128xf32>
    %213 = vector.extract_strided_slice %37 {offsets = [29, 0], sizes = [1, 128], strides = [1, 1]} : vector<31x128xf32> to vector<1x128xf32>
    %214 = vector.shape_cast %213 : vector<1x128xf32> to vector<1x1x128xf32>
    %215 = vector.extract_strided_slice %36 {offsets = [0, 29, 0], sizes = [4, 16, 128], strides = [1, 1, 1]} : vector<4x46x128xf32> to vector<4x16x128xf32>
    %216 = vector.broadcast %214 : vector<1x1x128xf32> to vector<4x16x128xf32>
    %217 = arith.mulf %215, %216 : vector<4x16x128xf32>
    %218 = arith.addf %212, %217 : vector<4x16x128xf32>
    %219 = vector.extract_strided_slice %37 {offsets = [30, 0], sizes = [1, 128], strides = [1, 1]} : vector<31x128xf32> to vector<1x128xf32>
    %220 = vector.shape_cast %219 : vector<1x128xf32> to vector<1x1x128xf32>
    %221 = vector.extract_strided_slice %36 {offsets = [0, 30, 0], sizes = [4, 16, 128], strides = [1, 1, 1]} : vector<4x46x128xf32> to vector<4x16x128xf32>
    %222 = vector.broadcast %220 : vector<1x1x128xf32> to vector<4x16x128xf32>
    %223 = arith.mulf %221, %222 : vector<4x16x128xf32>
    %224 = arith.addf %218, %223 : vector<4x16x128xf32>
    %c0_17 = arith.constant 0 : index
    %c0_18 = arith.constant 0 : index
    %225 = vector.load %arg5[%c0_17, %c0_18] : memref<1x128xf32, #tpu.memory_space<vmem>>, vector<1x128xf32>
    %226 = vector.shape_cast %225 : vector<1x128xf32> to vector<1x1x128xf32>
    %227 = vector.broadcast %226 : vector<1x1x128xf32> to vector<4x16x128xf32>
    %228 = arith.addf %224, %227 : vector<4x16x128xf32>
    %229 = arith.negf %228 : vector<4x16x128xf32>
    %230 = math.exp %229 : vector<4x16x128xf32>
    %cst_19 = arith.constant 1.000000e+00 : f32
    %231 = vector.broadcast %cst_19 : f32 to vector<4x16x128xf32>
    %232 = arith.addf %231, %230 : vector<4x16x128xf32>
    %233 = arith.divf %231, %232 : vector<4x16x128xf32>
    %234 = arith.mulf %228, %233 : vector<4x16x128xf32>
    %235 = vector.shape_cast %234 : vector<4x16x128xf32> to vector<64x128xf32>
    %c0_20 = arith.constant 0 : index
    %c0_21 = arith.constant 0 : index
    %236 = vector.load %arg6[%c0_20, %c0_21] : memref<128x64xf32, #tpu.memory_space<vmem>>, vector<128x64xf32>
    %cst_22 = arith.constant dense<0.000000e+00> : vector<64x64xf32>
    %237 = tpu.matmul %235, %236, %cst_22 {dimension_numbers = #tpu.dot_dimension_numbers<[1], [0], [0], [1], [0, 0, 1, 1], [], []>} : vector<64x128xf32>, vector<128x64xf32>, vector<64x64xf32> -> vector<64x64xf32>
    %c0_23 = arith.constant 0 : index
    %c0_24 = arith.constant 0 : index
    %238 = vector.load %arg7[%c0_23, %c0_24] : memref<1x64xf32, #tpu.memory_space<vmem>>, vector<1x64xf32>
    %239 = vector.broadcast %238 : vector<1x64xf32> to vector<64x64xf32>
    %240 = arith.addf %237, %239 : vector<64x64xf32>
    %241 = vector.shape_cast %240 : vector<64x64xf32> to vector<4x16x64xf32>
    %c0_25 = arith.constant 0 : index
    %c0_26 = arith.constant 0 : index
    %c0_27 = arith.constant 0 : index
    %242 = vector.load %arg8[%c0_25, %c0_26, %c0_27] : memref<4x16x64xf32, #tpu.memory_space<vmem>>, vector<4x16x64xf32>
    tpu.vector_store %arg8[%c0_25, %c0_26, %c0_27], %241 {strides = array<i32>} : memref<4x16x64xf32, #tpu.memory_space<vmem>>, vector<4x16x64xf32>,
    return
  }
  func.func @transform_0(%arg0: i32) -> (i32, i32, i32) {
    %c0_i32 = arith.constant 0 : i32
    %c0_i32_0 = arith.constant 0 : i32
    %c0_i32_1 = arith.constant 0 : i32
    return %arg0, %c0_i32, %c0_i32_0 : i32, i32, i32
  }
  func.func @transform_1(%arg0: i32) -> (i32, i32) {
    %c0_i32 = arith.constant 0 : i32
    %c0_i32_0 = arith.constant 0 : i32
    %c0_i32_1 = arith.constant 0 : i32
    return %c0_i32, %c0_i32_0 : i32, i32
  }
  func.func @transform_2(%arg0: i32) -> (i32, i32) {
    %c0_i32 = arith.constant 0 : i32
    %c0_i32_0 = arith.constant 0 : i32
    %c0_i32_1 = arith.constant 0 : i32
    return %c0_i32, %c0_i32_0 : i32, i32
  }
  func.func @transform_3(%arg0: i32) -> (i32, i32) {
    %c0_i32 = arith.constant 0 : i32
    %c0_i32_0 = arith.constant 0 : i32
    %c0_i32_1 = arith.constant 0 : i32
    return %c0_i32, %c0_i32_0 : i32, i32
  }
  func.func @transform_4(%arg0: i32) -> (i32, i32) {
    %c0_i32 = arith.constant 0 : i32
    %c0_i32_0 = arith.constant 0 : i32
    %c0_i32_1 = arith.constant 0 : i32
    return %c0_i32, %c0_i32_0 : i32, i32
  }
  func.func @transform_5(%arg0: i32) -> (i32, i32) {
    %c0_i32 = arith.constant 0 : i32
    %c0_i32_0 = arith.constant 0 : i32
    %c0_i32_1 = arith.constant 0 : i32
    return %c0_i32, %c0_i32_0 : i32, i32
  }
  func.func @transform_6(%arg0: i32) -> (i32, i32) {
    %c0_i32 = arith.constant 0 : i32
    %c0_i32_0 = arith.constant 0 : i32
    %c0_i32_1 = arith.constant 0 : i32
    return %c0_i32, %c0_i32_0 : i32, i32
  }
  func.func @transform_7(%arg0: i32) -> (i32, i32, i32) {
    %c0_i32 = arith.constant 0 : i32
    %c0_i32_0 = arith.constant 0 : i32
    %c0_i32_1 = arith.constant 0 : i32
    return %arg0, %c0_i32, %c0_i32_0 : i32, i32, i32
  }
}

</mosaic_0001>

<llo_original>
// kernel: tpu_custom_call.1
$region0: #{tpu_custom_call.1}
  #allocation0 [shape = 'u32[]', space=smem, size = 0x4, offset = 0x4, fixed_abs, tag = 'smem constant byte address 0x4 - core index']
  #allocation1 [shape = 'u32[144,128]{1,0:T(1,128)}', space=vmem, size = 0x12000, scoped, tag = 'internal scratch']
  %s0 = inlined_call_operand.vmem [shape: f32[8,16,64], index: 0, kind: input, shape index: {}]
  %s1 = inlined_call_operand.hbm [shape: f32[64,256], index: 1, kind: input, shape index: {}]
  %s2 = inlined_call_operand.vmem [shape: f32[1,256], index: 2, kind: input, shape index: {}]
  %s3 = inlined_call_operand.vmem [shape: f32[31,128], index: 3, kind: input, shape index: {}]
  %s4 = inlined_call_operand.vmem [shape: f32[1,128], index: 4, kind: input, shape index: {}]
  %s5 = inlined_call_operand.vmem [shape: f32[128,64], index: 5, kind: input, shape index: {}]
  %s6 = inlined_call_operand.vmem [shape: f32[1,64], index: 6, kind: input, shape index: {}]
  %s7 = inlined_call_operand.hbm [shape: f32[8,16,64], index: 7, kind: output, shape index: {}]
  %s8 = sld [smem:[#allocation0]]
  $region65: #{tpu_custom_call.1} parent=0
    _
  %s10 = ssub.s32 1, %s8
  %s11 = scalar_select 0, %s10, %s8
  $region1: #{tpu_custom_call.1} parent=0
    #allocation2 [shape = 'u8[65536]{0}', space=vmem, size = 0x10000, scoped, tag = 'input window, operand 1, single buffered']
    #allocation3 [shape = 's32[2]{0}', space=sflag, size = 0x8, scoped, tag = 'scoped memory for tpu_custom_call.1']
    #allocation4 [shape = 's32[2]{0}', space=sflag, size = 0x8, scoped, tag = 'scoped memory for tpu_custom_call.1']
    #allocation5 [shape = 'u8[65536]{0}', space=vmem, size = 0x10000, scoped, tag = 'output window, operand 0']
    %12 = vsyncpa [#allocation3], 0
    %13 = vsyncpa [#allocation4], 0
    %s14 = scalar_lea.sflag [#allocation4], 1
    %15 = vsyncpa %s14, 0
    loop: start=0, step=1, limit=4
    $region2: #{tpu_custom_call.1} parent=1 // loop_pre_header
      _
    $region3: #{tpu_custom_call.1} parent=1 // loop_header
      %s17 = sphi 0, %s21
      %p18 = scmp.ge.s32.totalorder %s17, 4
      %s27 = sphi 0, %s29
      %s30 = sphi 0, %s27
      %s31 = sphi 0, %s30
      %s47 = sphi 0, %s31
      %s51 = sphi 0, %s51
      %s53 = sphi 0, %s51
      %s54 = sphi 0, %s53
      %s68 = sphi 0, %s54
      %s72 = sphi 0, %s72
      %s74 = sphi 0, %s72
      %s75 = sphi 0, %s74
      %s89 = sphi 0, %s75
      %s93 = sphi 0, %s93
      %s95 = sphi 0, %s93
      %s96 = sphi 0, %s95
      %s110 = sphi 0, %s96
      %s114 = sphi 0, %s114
      %s116 = sphi 0, %s114
      %s117 = sphi 0, %s116
      %s131 = sphi 0, %s117
      %s135 = sphi 0, %s135
      %s137 = sphi 0, %s135
      %s138 = sphi 0, %s137
      %s152 = sphi 0, %s138
      %s156 = sphi 0, %s156
      %s158 = sphi 0, %s156
      %s159 = sphi 0, %s158
      %s173 = sphi 0, %s159
      %s179 = sphi 0, %s181
      %s182 = sphi 0, %s179
      %s183 = sphi 0, %s182
      %s199 = sphi 0, %s183
    $region4: #{tpu_custom_call.1} parent=1 // loop_header_branch
      %20 = sbr.rel (%p18) target = $region8
    $region5: #{tpu_custom_call.1} parent=1 // loop_body
      %s22 = ssub.s32 %s17, 1
      %s23 = ssub.s32 %s17, 2
      %s24 = sadd.s32 %s17, 1
      %s25 = ssub.s32 %s17, %s24
      %p26 = scmp.eq.s32.totalorder %s25, 0
      %s28 = sadd.s32 %s27, 1
      %s29 = scalar_select %p26, %s27, %s28
      %p32 = pneg %p26
      %p33 = scmp.eq.s32.totalorder %s17, 1
      %p34 = por %p32, %p33
      %p35 = scmp.ne.s32.totalorder %s27, %s30
      %p36 = scmp.eq.s32.totalorder %s17, 0
      %p37 = por %p35, %p36
      %p38 = scmp.ne.s32.totalorder %s27, %s30
      %p39 = scmp.eq.s32.totalorder %s22, 1
      %p40 = por %p38, %p39
      %p41 = scmp.ne.s32.totalorder %s30, %s31
      %p42 = scmp.eq.s32.totalorder %s22, 0
      %p43 = por %p41, %p42
      %p44 = scmp.ne.s32.totalorder %s30, %s31
      %p45 = scmp.eq.s32.totalorder %s23, 1
      %p46 = por %p44, %p45
      %p48 = scmp.ne.s32.totalorder %s31, %s47
      %p49 = scmp.eq.s32.totalorder %s23, 0
      %p50 = por %p48, %p49
      %s52 = sadd.s32 %s51, 1
      %p55 = scmp.eq.s32.totalorder %s17, 1
      %p56 = scmp.ne.s32.totalorder %s51, %s53
      %p57 = scmp.eq.s32.totalorder %s17, 0
      %p58 = por %p56, %p57
      %p59 = scmp.ne.s32.totalorder %s51, %s53
      %p60 = scmp.eq.s32.totalorder %s22, 1
      %p61 = por %p59, %p60
      %p62 = scmp.ne.s32.totalorder %s53, %s54
      %p63 = scmp.eq.s32.totalorder %s22, 0
      %p64 = por %p62, %p63
      %p65 = scmp.ne.s32.totalorder %s53, %s54
      %p66 = scmp.eq.s32.totalorder %s23, 1
      %p67 = por %p65, %p66
      %p69 = scmp.ne.s32.totalorder %s54, %s68
      %p70 = scmp.eq.s32.totalorder %s23, 0
      %p71 = por %p69, %p70
      %s73 = sadd.s32 %s72, 1
      %p76 = scmp.eq.s32.totalorder %s17, 1
      %p77 = scmp.ne.s32.totalorder %s72, %s74
      %p78 = scmp.eq.s32.totalorder %s17, 0
      %p79 = por %p77, %p78
      %p80 = scmp.ne.s32.totalorder %s72, %s74
      %p81 = scmp.eq.s32.totalorder %s22, 1
      %p82 = por %p80, %p81
      %p83 = scmp.ne.s32.totalorder %s74, %s75
      %p84 = scmp.eq.s32.totalorder %s22, 0
      %p85 = por %p83, %p84
      %p86 = scmp.ne.s32.totalorder %s74, %s75
      %p87 = scmp.eq.s32.totalorder %s23, 1
      %p88 = por %p86, %p87
      %p90 = scmp.ne.s32.totalorder %s75, %s89
      %p91 = scmp.eq.s32.totalorder %s23, 0
      %p92 = por %p90, %p91
      %s94 = sadd.s32 %s93, 1
      %p97 = scmp.eq.s32.totalorder %s17, 1
      %p98 = scmp.ne.s32.totalorder %s93, %s95
      %p99 = scmp.eq.s32.totalorder %s17, 0
      %p100 = por %p98, %p99
      %p101 = scmp.ne.s32.totalorder %s93, %s95
      %p102 = scmp.eq.s32.totalorder %s22, 1
      %p103 = por %p101, %p102
      %p104 = scmp.ne.s32.totalorder %s95, %s96
      %p105 = scmp.eq.s32.totalorder %s22, 0
      %p106 = por %p104, %p105
      %p107 = scmp.ne.s32.totalorder %s95, %s96
      %p108 = scmp.eq.s32.totalorder %s23, 1
      %p109 = por %p107, %p108
      %p111 = scmp.ne.s32.totalorder %s96, %s110
      %p112 = scmp.eq.s32.totalorder %s23, 0
      %p113 = por %p111, %p112
      %s115 = sadd.s32 %s114, 1
      %p118 = scmp.eq.s32.totalorder %s17, 1
      %p119 = scmp.ne.s32.totalorder %s114, %s116
      %p120 = scmp.eq.s32.totalorder %s17, 0
      %p121 = por %p119, %p120
      %p122 = scmp.ne.s32.totalorder %s114, %s116
      %p123 = scmp.eq.s32.totalorder %s22, 1
      %p124 = por %p122, %p123
      %p125 = scmp.ne.s32.totalorder %s116, %s117
      %p126 = scmp.eq.s32.totalorder %s22, 0
      %p127 = por %p125, %p126
      %p128 = scmp.ne.s32.totalorder %s116, %s117
      %p129 = scmp.eq.s32.totalorder %s23, 1
      %p130 = por %p128, %p129
      %p132 = scmp.ne.s32.totalorder %s117, %s131
      %p133 = scmp.eq.s32.totalorder %s23, 0
      %p134 = por %p132, %p133
      %s136 = sadd.s32 %s135, 1
      %p139 = scmp.eq.s32.totalorder %s17, 1
      %p140 = scmp.ne.s32.totalorder %s135, %s137
      %p141 = scmp.eq.s32.totalorder %s17, 0
      %p142 = por %p140, %p141
      %p143 = scmp.ne.s32.totalorder %s135, %s137
      %p144 = scmp.eq.s32.totalorder %s22, 1
      %p145 = por %p143, %p144
      %p146 = scmp.ne.s32.totalorder %s137, %s138
      %p147 = scmp.eq.s32.totalorder %s22, 0
      %p148 = por %p146, %p147
      %p149 = scmp.ne.s32.totalorder %s137, %s138
      %p150 = scmp.eq.s32.totalorder %s23, 1
      %p151 = por %p149, %p150
      %p153 = scmp.ne.s32.totalorder %s138, %s152
      %p154 = scmp.eq.s32.totalorder %s23, 0
      %p155 = por %p153, %p154
      %s157 = sadd.s32 %s156, 1
      %p160 = scmp.eq.s32.totalorder %s17, 1
      %p161 = scmp.ne.s32.totalorder %s156, %s158
      %p162 = scmp.eq.s32.totalorder %s17, 0
      %p163 = por %p161, %p162
      %p164 = scmp.ne.s32.totalorder %s156, %s158
      %p165 = scmp.eq.s32.totalorder %s22, 1
      %p166 = por %p164, %p165
      %p167 = scmp.ne.s32.totalorder %s158, %s159
      %p168 = scmp.eq.s32.totalorder %s22, 0
      %p169 = por %p167, %p168
      %p170 = scmp.ne.s32.totalorder %s158, %s159
      %p171 = scmp.eq.s32.totalorder %s23, 1
      %p172 = por %p170, %p171
      %p174 = scmp.ne.s32.totalorder %s159, %s173
      %p175 = scmp.eq.s32.totalorder %s23, 0
      %p176 = por %p174, %p175
      %s177 = ssub.s32 %s17, %s24
      %p178 = scmp.eq.s32.totalorder %s177, 0
      %s180 = sadd.s32 %s179, 1
      %s181 = scalar_select %p178, %s179, %s180
      %p184 = pneg %p178
      %p185 = scmp.eq.s32.totalorder %s17, 1
      %p186 = por %p184, %p185
      %p187 = scmp.ne.s32.totalorder %s179, %s182
      %p188 = scmp.eq.s32.totalorder %s17, 0
      %p189 = por %p187, %p188
      %p190 = scmp.ne.s32.totalorder %s179, %s182
      %p191 = scmp.eq.s32.totalorder %s22, 1
      %p192 = por %p190, %p191
      %p193 = scmp.ne.s32.totalorder %s182, %s183
      %p194 = scmp.eq.s32.totalorder %s22, 0
      %p195 = por %p193, %p194
      %p196 = scmp.ne.s32.totalorder %s182, %s183
      %p197 = scmp.eq.s32.totalorder %s23, 1
      %p198 = por %p196, %p197
      %p200 = scmp.ne.s32.totalorder %s183, %s199
      %p201 = scmp.eq.s32.totalorder %s23, 0
      %p202 = por %p200, %p201
      %p203 = scmp.le.s32.totalorder 1, %s17
      %p204 = scmp.lt.s32.totalorder %s17, 3
      %p205 = pnand %p203, %p204
      %p206 = pneg %p205
      // Predicated region
      $region9: #{tpu_custom_call.1} parent=5 // pred_check
        _
      $region10: #{tpu_custom_call.1} parent=5 // pred_check_branch
        %208 = sbr.rel (%p205) target = $region12
      $region11: #{tpu_custom_call.1} parent=5 // pred_region
        %s209 = ssub.s32 %s17, 1
        // Predicated region
        $region13: #{tpu_custom_call.1} parent=11 // pred_check
          %p210 = pneg %p64
        $region14: #{tpu_custom_call.1} parent=11 // pred_check_branch
          %212 = sbr.rel (%p210) target = $region16
        $region15: #{tpu_custom_call.1} parent=11 // pred_region
          %s214 = ssub.s32 2048, 2048
          %215 = vsyncadd [#allocation3], %s214
          %s216 = sshll.u32 [#allocation2], 4
          %s217 = int_to_ptr.vmem [resolvable:$true] %s216
          %222 = dma.hbm_to_vmem [thread:$0]  %s1, 2048, %s217, [#allocation3], 256, 256, 16
        $region16: #{tpu_custom_call.1} parent=11 // pred_fallthru
          _
        // Predicated region
        $region17: #{tpu_custom_call.1} parent=11 // pred_check
          %p223 = pneg %p85
        $region18: #{tpu_custom_call.1} parent=11 // pred_check_branch
          %225 = sbr.rel (%p223) target = $region20
        $region19: #{tpu_custom_call.1} parent=11 // pred_region
          _
        $region20: #{tpu_custom_call.1} parent=11 // pred_fallthru
          _
        // Predicated region
        $region21: #{tpu_custom_call.1} parent=11 // pred_check
          %p226 = pneg %p106
        $region22: #{tpu_custom_call.1} parent=11 // pred_check_branch
          %228 = sbr.rel (%p226) target = $region24
        $region23: #{tpu_custom_call.1} parent=11 // pred_region
          _
        $region24: #{tpu_custom_call.1} parent=11 // pred_fallthru
          _
        // Predicated region
        $region25: #{tpu_custom_call.1} parent=11 // pred_check
          %p229 = pneg %p127
        $region26: #{tpu_custom_call.1} parent=11 // pred_check_branch
          %231 = sbr.rel (%p229) target = $region28
        $region27: #{tpu_custom_call.1} parent=11 // pred_region
          _
        $region28: #{tpu_custom_call.1} parent=11 // pred_fallthru
          _
        // Predicated region
        $region29: #{tpu_custom_call.1} parent=11 // pred_check
          %p232 = pneg %p148
        $region30: #{tpu_custom_call.1} parent=11 // pred_check_branch
          %234 = sbr.rel (%p232) target = $region32
        $region31: #{tpu_custom_call.1} parent=11 // pred_region
          _
        $region32: #{tpu_custom_call.1} parent=11 // pred_fallthru
          _
        // Predicated region
        $region33: #{tpu_custom_call.1} parent=11 // pred_check
          %p235 = pneg %p169
        $region34: #{tpu_custom_call.1} parent=11 // pred_check_branch
          %237 = sbr.rel (%p235) target = $region36
        $region35: #{tpu_custom_call.1} parent=11 // pred_region
          _
        $region36: #{tpu_custom_call.1} parent=11 // pred_fallthru
          _
      $region12: #{tpu_custom_call.1} parent=5 // pred_fallthru
        _
      %p238 = scmp.lt.s32.totalorder %s17, 2
      // Predicated region
      $region37: #{tpu_custom_call.1} parent=5 // pred_check
        %p239 = pneg %p238
      $region38: #{tpu_custom_call.1} parent=5 // pred_check_branch
        %241 = sbr.rel (%p239) target = $region40
      $region39: #{tpu_custom_call.1} parent=5 // pred_region
        // Predicated region
        $region41: #{tpu_custom_call.1} parent=39 // pred_check
          %p242 = pneg %p37
        $region42: #{tpu_custom_call.1} parent=39 // pred_check_branch
          %244 = sbr.rel (%p242) target = $region44
        $region43: #{tpu_custom_call.1} parent=39 // pred_region
          %s245 = smul.u32 4, %s17
          %p246 = scmp.lt.s32.totalorder %s245, 7
          %s247 = scalar_select %p246, %s245, 7
          %s248 = smul.addr %s247, 2
          %s249 = smul.addr %s248, 8
          %s250 = scalar_lea.vmem %s0, %s249
          %s251 = smul.u32 4, %s17
        $region44: #{tpu_custom_call.1} parent=39 // pred_fallthru
          _
      $region40: #{tpu_custom_call.1} parent=5 // pred_fallthru
        _
      %p252 = scmp.le.s32.totalorder 1, %s17
      %p253 = scmp.lt.s32.totalorder %s17, 3
      %p254 = pnand %p252, %p253
      %p255 = pneg %p254
      // Predicated region
      $region45: #{tpu_custom_call.1} parent=5 // pred_check
        _
      $region46: #{tpu_custom_call.1} parent=5 // pred_check_branch
        %257 = sbr.rel (%p254) target = $region48
      $region47: #{tpu_custom_call.1} parent=5 // pred_region
        %s258 = ssub.s32 %s17, 1
        // Predicated region
        $region49: #{tpu_custom_call.1} parent=47 // pred_check
          %p259 = pneg %p64
        $region50: #{tpu_custom_call.1} parent=47 // pred_check_branch
          %261 = sbr.rel (%p259) target = $region52
        $region51: #{tpu_custom_call.1} parent=47 // pred_region
          %262 = dma.done [#allocation3], 2048
        $region52: #{tpu_custom_call.1} parent=47 // pred_fallthru
          _
        %s263 = smul.u32 4, %s22
        %p264 = scmp.lt.s32.totalorder %s263, 7
        %s265 = scalar_select %p264, %s263, 7
        %s266 = smul.addr %s265, 2
        %s267 = smul.addr %s266, 8
        %s268 = scalar_lea.vmem %s0, %s267
        %p269 = pneg %p43
        %p270 = pneg %p40
        %p271 = pneg %p64
        %p272 = pneg %p61
        %p273 = pneg %p85
        %p274 = pneg %p82
        %p275 = pneg %p106
        %p276 = pneg %p103
        %p277 = pneg %p127
        %p278 = pneg %p124
        %p279 = pneg %p148
        %p280 = pneg %p145
        %p281 = pneg %p169
        %p282 = pneg %p166
        %p283 = pneg %p195
        %p284 = pneg %p192
        %s285 = sand.u32 %s182, 1
        %s286 = scalar_lea.sflag [#allocation4], %s285
        %s287 = sand.u32 %s182, 1
        %s288 = smul.addr %s287, 64
        %s289 = scalar_lea.vmem [#allocation5], %s288
        %s290 = smul.u32 4, %s22
        %p291 = scmp.lt.s32.totalorder %s290, 7
        %s292 = scalar_select %p291, %s290, 7
        %s293 = smul.addr %s292, 2
        %s294 = smul.addr %s293, 8
        %s295 = scalar_lea.vmem %s0, %s294
        %s296 = smul.u32 4, %s22
        %s297 = smul.u32 4, %s22
        %v298 = vld [vmem:[%s295] sm:$0xff]
        %v299 = vld [vmem:[%s295 + $0x8] sm:$0xff]
        %v300 = vld [vmem:[%s295 + $0x10] sm:$0xff]
        %v301 = vld [vmem:[%s295 + $0x18] sm:$0xff]
        %v302 = vld [vmem:[%s295 + $0x20] sm:$0xff]
        %v303 = vld [vmem:[%s295 + $0x28] sm:$0xff]
        %v304 = vld [vmem:[%s295 + $0x30] sm:$0xff]
        %v305 = vld [vmem:[%s295 + $0x38] sm:$0xff]
        %vm306 = vcmask 523264
        %v307 = vsel %vm306, %v298, 0.0
        %308 = vadd.xlane.f32.xlu0 %v307
        %v309 = vpop.xlane.xlu0 %308
        %v310 = vsel %vm306, %v299, 0.0
        %311 = vadd.xlane.f32.xlu0 %v310
        %v312 = vpop.xlane.xlu0 %311
        %v313 = vsel %vm306, %v300, 0.0
        %314 = vadd.xlane.f32.xlu0 %v313
        %v315 = vpop.xlane.xlu0 %314
        %v316 = vsel %vm306, %v301, 0.0
        %317 = vadd.xlane.f32.xlu0 %v316
        %v318 = vpop.xlane.xlu0 %317
        %v319 = vsel %vm306, %v302, 0.0
        %320 = vadd.xlane.f32.xlu0 %v319
        %v321 = vpop.xlane.xlu0 %320
        %v322 = vsel %vm306, %v303, 0.0
        %323 = vadd.xlane.f32.xlu0 %v322
        %v324 = vpop.xlane.xlu0 %323
        %v325 = vsel %vm306, %v304, 0.0
        %326 = vadd.xlane.f32.xlu0 %v325
        %v327 = vpop.xlane.xlu0 %326
        %v328 = vsel %vm306, %v305, 0.0
        %329 = vadd.xlane.f32.xlu0 %v328
        %v330 = vpop.xlane.xlu0 %329
        %v331 = vrcp.pop 64.0
        %v332 = vmul.f32 %v309, %v331
        %v333 = vmul.f32 %v312, %v331
        %v334 = vmul.f32 %v315, %v331
        %v335 = vmul.f32 %v318, %v331
        %v336 = vmul.f32 %v321, %v331
        %v337 = vmul.f32 %v324, %v331
        %v338 = vmul.f32 %v327, %v331
        %v339 = vmul.f32 %v330, %v331
        %v340 = vsub.f32 %v298, %v332
        %v341 = vsub.f32 %v299, %v333
        %v342 = vsub.f32 %v300, %v334
        %v343 = vsub.f32 %v301, %v335
        %v344 = vsub.f32 %v302, %v336
        %v345 = vsub.f32 %v303, %v337
        %v346 = vsub.f32 %v304, %v338
        %v347 = vsub.f32 %v305, %v339
        %v348 = vmul.f32 %v340, %v340
        %v349 = vmul.f32 %v341, %v341
        %v350 = vmul.f32 %v342, %v342
        %v351 = vmul.f32 %v343, %v343
        %v352 = vmul.f32 %v344, %v344
        %v353 = vmul.f32 %v345, %v345
        %v354 = vmul.f32 %v346, %v346
        %v355 = vmul.f32 %v347, %v347
        %v356 = vsel %vm306, %v348, 0.0
        %357 = vadd.xlane.f32.xlu0 %v356
        %v358 = vpop.xlane.xlu0 %357
        %v359 = vsel %vm306, %v349, 0.0
        %360 = vadd.xlane.f32.xlu0 %v359
        %v361 = vpop.xlane.xlu0 %360
        %v362 = vsel %vm306, %v350, 0.0
        %363 = vadd.xlane.f32.xlu0 %v362
        %v364 = vpop.xlane.xlu0 %363
        %v365 = vsel %vm306, %v351, 0.0
        %366 = vadd.xlane.f32.xlu0 %v365
        %v367 = vpop.xlane.xlu0 %366
        %v368 = vsel %vm306, %v352, 0.0
        %369 = vadd.xlane.f32.xlu0 %v368
        %v370 = vpop.xlane.xlu0 %369
        %v371 = vsel %vm306, %v353, 0.0
        %372 = vadd.xlane.f32.xlu0 %v371
        %v373 = vpop.xlane.xlu0 %372
        %v374 = vsel %vm306, %v354, 0.0
        %375 = vadd.xlane.f32.xlu0 %v374
        %v376 = vpop.xlane.xlu0 %375
        %v377 = vsel %vm306, %v355, 0.0
        %378 = vadd.xlane.f32.xlu0 %v377
        %v379 = vpop.xlane.xlu0 %378
        %v380 = vmul.f32 %v358, %v331
        %v381 = vmul.f32 %v361, %v331
        %v382 = vmul.f32 %v364, %v331
        %v383 = vmul.f32 %v367, %v331
        %v384 = vmul.f32 %v370, %v331
        %v385 = vmul.f32 %v373, %v331
        %v386 = vmul.f32 %v376, %v331
        %v387 = vmul.f32 %v379, %v331
        %v388 = vadd.f32 %v380, 1e-05
        %v389 = vadd.f32 %v381, 1e-05
        %v390 = vadd.f32 %v382, 1e-05
        %v391 = vadd.f32 %v383, 1e-05
        %v392 = vadd.f32 %v384, 1e-05
        %v393 = vadd.f32 %v385, 1e-05
        %v394 = vadd.f32 %v386, 1e-05
        %v395 = vadd.f32 %v387, 1e-05
        %v396 = vrsqrt.pop %v388
        %v397 = vrsqrt.pop %v389
        %v398 = vrsqrt.pop %v390
        %v399 = vrsqrt.pop %v391
        %v400 = vrsqrt.pop %v392
        %v401 = vrsqrt.pop %v393
        %v402 = vrsqrt.pop %v394
        %v403 = vrsqrt.pop %v395
        %v404 = vmul.f32 %v340, %v396
        %v405 = vmul.f32 %v341, %v397
        %v406 = vmul.f32 %v342, %v398
        %v407 = vmul.f32 %v343, %v399
        %v408 = vmul.f32 %v344, %v400
        %v409 = vmul.f32 %v345, %v401
        %v410 = vmul.f32 %v346, %v402
        %v411 = vmul.f32 %v347, %v403
        %v412 = vld [vmem:[#allocation2] sm:$0xff]
        %v413 = vld [vmem:[#allocation2 + $0x8] sm:$0xff]
        %v414 = vld [vmem:[#allocation2 + $0x10] sm:$0xff]
        %v415 = vld [vmem:[#allocation2 + $0x18] sm:$0xff]
        %v416 = vld [vmem:[#allocation2 + $0x20] sm:$0xff]
        %v417 = vld [vmem:[#allocation2 + $0x28] sm:$0xff]
        %v418 = vld [vmem:[#allocation2 + $0x30] sm:$0xff]
        %v419 = vld [vmem:[#allocation2 + $0x38] sm:$0xff]
        %v420 = vld [vmem:[#allocation2 + $0x40] sm:$0xff]
        %v421 = vld [vmem:[#allocation2 + $0x48] sm:$0xff]
        %v422 = vld [vmem:[#allocation2 + $0x50] sm:$0xff]
        %v423 = vld [vmem:[#allocation2 + $0x58] sm:$0xff]
        %v424 = vld [vmem:[#allocation2 + $0x60] sm:$0xff]
        %v425 = vld [vmem:[#allocation2 + $0x68] sm:$0xff]
        %v426 = vld [vmem:[#allocation2 + $0x70] sm:$0xff]
        %v427 = vld [vmem:[#allocation2 + $0x78] sm:$0xff]
        %v428 = vld [vmem:[%s2] sm:$0x3]
        %v430 = vlaneseq
        %v431 = vshrl.u32 %v430, 7
        %v432 = vsub.s32 0, %v431
        %v433 = vrot.slane %v428, %v432
        %v434 = vlaneseq
        %v435 = vshrl.u32 %v434, 7
        %v436 = vsub.s32 1, %v435
        %v437 = vrot.slane %v428, %v436
        %v441 = vsel %vm306, %v404, 0
        %v444 = vsel %vm306, %v405, 0
        %v447 = vsel %vm306, %v406, 0
        %v450 = vsel %vm306, %v407, 0
        %v453 = vsel %vm306, %v408, 0
        %v456 = vsel %vm306, %v409, 0
        %v459 = vsel %vm306, %v410, 0
        %v462 = vsel %vm306, %v411, 0
        %464 = vmatprep.subr.mxu0 %v413
        %465 = vmatpush1.msra.mxu0 %v412
        %466 = vmatprep.subr.mxu0 %v415
        %467 = vmatpush1.msra.mxu0 %v414
        %468 = vmatprep.subr.mxu0 %v417
        %469 = vmatpush1.msra.mxu0 %v416
        %470 = vmatprep.subr.mxu0 %v419
        %471 = vmatpush1.msra.mxu0 %v418
        %472 = vmatprep.subr.mxu0 %v421
        %473 = vmatpush1.msra.mxu0 %v420
        %474 = vmatprep.subr.mxu0 %v423
        %475 = vmatpush1.msra.mxu0 %v422
        %476 = vmatprep.subr.mxu0 %v425
        %477 = vmatpush1.msra.mxu0 %v424
        %478 = vmatprep.subr.mxu0 %v427
        %479 = vmatpush1.msra.mxu0 %v426
        %480 = vmatprep.subr.mxu0 0.0
        %481 = vmatpush1.msra.mxu0 0.0
        %482 = vmatprep.subr.mxu0 0.0
        %483 = vmatpush1.msra.mxu0 0.0
        %484 = vmatprep.subr.mxu0 0.0
        %485 = vmatpush1.msra.mxu0 0.0
        %486 = vmatprep.subr.mxu0 0.0
        %487 = vmatpush1.msra.mxu0 0.0
        %488 = vmatprep.subr.mxu0 0.0
        %489 = vmatpush1.msra.mxu0 0.0
        %490 = vmatprep.subr.mxu0 0.0
        %491 = vmatpush1.msra.mxu0 0.0
        %492 = vmatprep.subr.mxu0 0.0
        %493 = vmatpush1.msra.mxu0 0.0
        %494 = vmatprep.subr.mxu0 0.0
        %495 = vmatpush1.msra.mxu0 0.0
        %496 = vmatprep.subr.mxu0 0.0
        %497 = vmatpush1.msra.mxu0 0.0
        %498 = vmatprep.subr.mxu0 0.0
        %499 = vmatpush1.msra.mxu0 0.0
        %500 = vmatprep.subr.mxu0 0.0
        %501 = vmatpush1.msra.mxu0 0.0
        %502 = vmatprep.subr.mxu0 0.0
        %503 = vmatpush1.msra.mxu0 0.0
        %504 = vmatprep.subr.mxu0 0.0
        %505 = vmatpush1.msra.mxu0 0.0
        %506 = vmatprep.subr.mxu0 0.0
        %507 = vmatpush1.msra.mxu0 0.0
        %508 = vmatprep.subr.mxu0 0.0
        %509 = vmatpush1.msra.mxu0 0.0
        %510 = vmatprep.subr.mxu0 0.0
        %511 = vmatpush1.msra.mxu0 0.0
        %512 = vmatprep.subr.mxu0 0.0
        %513 = vmatpush1.msra.mxu0 0.0
        %514 = vmatprep.subr.mxu0 0.0
        %515 = vmatpush1.msra.mxu0 0.0
        %516 = vmatprep.subr.mxu0 0.0
        %517 = vmatpush1.msra.mxu0 0.0
        %518 = vmatprep.subr.mxu0 0.0
        %519 = vmatpush1.msra.mxu0 0.0
        %520 = vmatprep.subr.mxu0 0.0
        %521 = vmatpush1.msra.mxu0 0.0
        %522 = vmatprep.subr.mxu0 0.0
        %523 = vmatpush1.msra.mxu0 0.0
        %524 = vmatprep.subr.mxu0 0.0
        %525 = vmatpush1.msra.mxu0 0.0
        %526 = vmatprep.subr.mxu0 0.0
        %527 = vmatpush1.msra.mxu0 0.0
        %528 = vmatprep.mubr.f32.mxu0 0.0
        %529 = vmatmul.mubr.f32.gmra.mrb[0].mxu0 %v441
        %v530 = vpop.f32.mrb[0].mxu0
        %v531 = vadd.f32 %v433, %v530
        %v532 = vpop.f32.mrb[0].mxu0
        %v533 = vadd.f32 %v437, %v532
        %534 = vmatprep.mubr.f32.mxu0 0.0
        %535 = vmatmul.mubr.f32.gmra.mrb[0].mxu0 %v444
        %v536 = vpop.f32.mrb[0].mxu0
        %v537 = vadd.f32 %v433, %v536
        %v538 = vpop.f32.mrb[0].mxu0
        %v539 = vadd.f32 %v437, %v538
        %540 = vmatprep.mubr.f32.mxu0 0.0
        %541 = vmatmul.mubr.f32.gmra.mrb[0].mxu0 %v447
        %v542 = vpop.f32.mrb[0].mxu0
        %v543 = vadd.f32 %v433, %v542
        %v544 = vpop.f32.mrb[0].mxu0
        %v545 = vadd.f32 %v437, %v544
        %546 = vmatprep.mubr.f32.mxu0 0.0
        %547 = vmatmul.mubr.f32.gmra.mrb[0].mxu0 %v450
        %v548 = vpop.f32.mrb[0].mxu0
        %v549 = vadd.f32 %v433, %v548
        %v550 = vpop.f32.mrb[0].mxu0
        %v551 = vadd.f32 %v437, %v550
        %552 = vmatprep.mubr.f32.mxu0 0.0
        %553 = vmatmul.mubr.f32.gmra.mrb[0].mxu0 %v453
        %v554 = vpop.f32.mrb[0].mxu0
        %v555 = vadd.f32 %v433, %v554
        %v556 = vpop.f32.mrb[0].mxu0
        %v557 = vadd.f32 %v437, %v556
        %558 = vmatprep.mubr.f32.mxu0 0.0
        %559 = vmatmul.mubr.f32.gmra.mrb[0].mxu0 %v456
        %v560 = vpop.f32.mrb[0].mxu0
        %v561 = vadd.f32 %v433, %v560
        %v562 = vpop.f32.mrb[0].mxu0
        %v563 = vadd.f32 %v437, %v562
        %564 = vmatprep.mubr.f32.mxu0 0.0
        %565 = vmatmul.mubr.f32.gmra.mrb[0].mxu0 %v459
        %v566 = vpop.f32.mrb[0].mxu0
        %v567 = vadd.f32 %v433, %v566
        %v568 = vpop.f32.mrb[0].mxu0
        %v569 = vadd.f32 %v437, %v568
        %570 = vmatprep.mubr.f32.mxu0 0.0
        %571 = vmatmul.mubr.f32.gmra.mrb[0].mxu0 %v462
        %v572 = vpop.f32.mrb[0].mxu0
        %v573 = vadd.f32 %v433, %v572
        %v574 = vpop.f32.mrb[0].mxu0
        %v575 = vadd.f32 %v437, %v574
        %576 = vdwg.mxu0
        %v577 = vxor.u32 %v533, 2147483648
        %v578 = vxor.u32 %v539, 2147483648
        %v579 = vxor.u32 %v545, 2147483648
        %v580 = vxor.u32 %v551, 2147483648
        %v581 = vxor.u32 %v557, 2147483648
        %v582 = vxor.u32 %v563, 2147483648
        %v583 = vxor.u32 %v569, 2147483648
        %v584 = vxor.u32 %v575, 2147483648
        %v585 = vmul.f32 %v577, 1.442695
        %v586 = vpow.pop %v585
        %v587 = vmul.f32 %v578, 1.442695
        %v588 = vpow.pop %v587
        %v589 = vmul.f32 %v579, 1.442695
        %v590 = vpow.pop %v589
        %v591 = vmul.f32 %v580, 1.442695
        %v592 = vpow.pop %v591
        %v593 = vmul.f32 %v581, 1.442695
        %v594 = vpow.pop %v593
        %v595 = vmul.f32 %v582, 1.442695
        %v596 = vpow.pop %v595
        %v597 = vmul.f32 %v583, 1.442695
        %v598 = vpow.pop %v597
        %v599 = vmul.f32 %v584, 1.442695
        %v600 = vpow.pop %v599
        %v601 = vadd.f32 %v586, 1.0
        %v602 = vadd.f32 %v588, 1.0
        %v603 = vadd.f32 %v590, 1.0
        %v604 = vadd.f32 %v592, 1.0
        %v605 = vadd.f32 %v594, 1.0
        %v606 = vadd.f32 %v596, 1.0
        %v607 = vadd.f32 %v598, 1.0
        %v608 = vadd.f32 %v600, 1.0
        %v609 = vrcp.pop %v601
        %v610 = vmul.f32 1.0, %v609
        %v611 = vrcp.pop %v602
        %v612 = vmul.f32 1.0, %v611
        %v613 = vrcp.pop %v603
        %v614 = vmul.f32 1.0, %v613
        %v615 = vrcp.pop %v604
        %v616 = vmul.f32 1.0, %v615
        %v617 = vrcp.pop %v605
        %v618 = vmul.f32 1.0, %v617
        %v619 = vrcp.pop %v606
        %v620 = vmul.f32 1.0, %v619
        %v621 = vrcp.pop %v607
        %v622 = vmul.f32 1.0, %v621
        %v623 = vrcp.pop %v608
        %v624 = vmul.f32 1.0, %v623
        %v625 = vmul.f32 %v531, %v610
        %v626 = vmul.f32 %v537, %v612
        %v627 = vmul.f32 %v543, %v614
        %v628 = vmul.f32 %v549, %v616
        %v629 = vmul.f32 %v555, %v618
        %v630 = vmul.f32 %v561, %v620
        %v631 = vmul.f32 %v567, %v622
        %v632 = vmul.f32 %v573, %v624
        %vm641 = vcmask 1046528
        %v642 = vrot.slane %v625, 1
        %v643 = vrot.slane %v626, 1
        %v644 = vsel %vm641, %v642, %v643
        %v645 = vrot.slane %v627, 1
        %v646 = vrot.slane %v628, 1
        %v647 = vsel %vm641, %v645, %v646
        %v648 = vrot.slane %v629, 1
        %v649 = vrot.slane %v630, 1
        %v650 = vsel %vm641, %v648, %v649
        %v651 = vrot.slane %v631, 1
        %v652 = vrot.slane %v632, 1
        %v653 = vsel %vm641, %v651, %v652
        %v666 = vsel %vm641, 0.0, %v642
        %v667 = vsel %vm641, 0.0, %v645
        %v668 = vsel %vm641, 0.0, %v648
        %v669 = vsel %vm641, 0.0, %v651
        %v670 = vsel %vm641, %v643, 0.0
        %v671 = vsel %vm641, %v646, 0.0
        %v672 = vsel %vm641, %v649, 0.0
        %v673 = vsel %vm641, %v652, 0.0
        %v674 = vld [vmem:[%s3] sm:$0xff]
        %v675 = vld [vmem:[%s3 + $0x8] sm:$0xff]
        %v676 = vld [vmem:[%s3 + $0x10] sm:$0xff]
        %v677 = vld [vmem:[%s3 + $0x18] sm:$0x7f]
        %v678 = vlaneseq
        %v679 = vshrl.u32 %v678, 7
        %v680 = vsub.s32 0, %v679
        %v681 = vrot.slane %v674, %v680
        %v682 = vmul.f32 %v681, 0.0
        %v683 = vmul.f32 %v666, %v681
        %v684 = vmul.f32 %v667, %v681
        %v685 = vmul.f32 %v668, %v681
        %v686 = vmul.f32 %v669, %v681
        %v687 = vadd.f32 %v682, 0.0
        %v688 = vadd.f32 %v683, 0.0
        %v689 = vadd.f32 %v684, 0.0
        %v690 = vadd.f32 %v685, 0.0
        %v691 = vadd.f32 %v686, 0.0
        %v692 = vlaneseq
        %v693 = vshrl.u32 %v692, 7
        %v694 = vsub.s32 1, %v693
        %v695 = vrot.slane %v674, %v694
        %v696 = vmul.f32 %v695, 0.0
        %v697 = vmul.f32 %v666, %v695
        %v698 = vmul.f32 %v644, %v695
        %v699 = vmul.f32 %v667, %v695
        %v700 = vmul.f32 %v647, %v695
        %v701 = vmul.f32 %v668, %v695
        %v702 = vmul.f32 %v650, %v695
        %v703 = vmul.f32 %v669, %v695
        %v704 = vmul.f32 %v653, %v695
        %v714 = vrot.slane %v696, 1
        %v715 = vrot.slane %v697, 1
        %v716 = vsel %vm641, %v714, %v715
        %v717 = vrot.slane %v698, 1
        %v718 = vsel %vm641, %v715, %v717
        %v719 = vrot.slane %v699, 1
        %v720 = vsel %vm641, %v714, %v719
        %v721 = vrot.slane %v700, 1
        %v722 = vsel %vm641, %v719, %v721
        %v723 = vrot.slane %v701, 1
        %v724 = vsel %vm641, %v714, %v723
        %v725 = vrot.slane %v702, 1
        %v726 = vsel %vm641, %v723, %v725
        %v727 = vrot.slane %v703, 1
        %v728 = vsel %vm641, %v714, %v727
        %v729 = vrot.slane %v704, 1
        %v730 = vsel %vm641, %v727, %v729
        %v739 = vadd.f32 %v687, %v716
        %v740 = vadd.f32 %v688, %v718
        %v741 = vadd.f32 %v687, %v720
        %v742 = vadd.f32 %v689, %v722
        %v743 = vadd.f32 %v687, %v724
        %v744 = vadd.f32 %v690, %v726
        %v745 = vadd.f32 %v687, %v728
        %v746 = vadd.f32 %v691, %v730
        %v747 = vlaneseq
        %v748 = vshrl.u32 %v747, 7
        %v749 = vsub.s32 2, %v748
        %v750 = vrot.slane %v674, %v749
        %v751 = vmul.f32 %v750, 0.0
        %v752 = vmul.f32 %v666, %v750
        %v753 = vmul.f32 %v644, %v750
        %v754 = vmul.f32 %v667, %v750
        %v755 = vmul.f32 %v647, %v750
        %v756 = vmul.f32 %v668, %v750
        %v757 = vmul.f32 %v650, %v750
        %v758 = vmul.f32 %v669, %v750
        %v759 = vmul.f32 %v653, %v750
        %vm769 = vcmask 1045504
        %v770 = vrot.slane %v751, 2
        %v771 = vrot.slane %v752, 2
        %v772 = vsel %vm769, %v770, %v771
        %v773 = vrot.slane %v753, 2
        %v774 = vsel %vm769, %v771, %v773
        %v775 = vrot.slane %v754, 2
        %v776 = vsel %vm769, %v770, %v775
        %v777 = vrot.slane %v755, 2
        %v778 = vsel %vm769, %v775, %v777
        %v779 = vrot.slane %v756, 2
        %v780 = vsel %vm769, %v770, %v779
        %v781 = vrot.slane %v757, 2
        %v782 = vsel %vm769, %v779, %v781
        %v783 = vrot.slane %v758, 2
        %v784 = vsel %vm769, %v770, %v783
        %v785 = vrot.slane %v759, 2
        %v786 = vsel %vm769, %v783, %v785
        %v795 = vadd.f32 %v739, %v772
        %v796 = vadd.f32 %v740, %v774
        %v797 = vadd.f32 %v741, %v776
        %v798 = vadd.f32 %v742, %v778
        %v799 = vadd.f32 %v743, %v780
        %v800 = vadd.f32 %v744, %v782
        %v801 = vadd.f32 %v745, %v784
        %v802 = vadd.f32 %v746, %v786
        %v803 = vlaneseq
        %v804 = vshrl.u32 %v803, 7
        %v805 = vsub.s32 3, %v804
        %v806 = vrot.slane %v674, %v805
        %v807 = vmul.f32 %v806, 0.0
        %v808 = vmul.f32 %v666, %v806
        %v809 = vmul.f32 %v644, %v806
        %v810 = vmul.f32 %v667, %v806
        %v811 = vmul.f32 %v647, %v806
        %v812 = vmul.f32 %v668, %v806
        %v813 = vmul.f32 %v650, %v806
        %v814 = vmul.f32 %v669, %v806
        %v815 = vmul.f32 %v653, %v806
        %vm825 = vcmask 1044480
        %v826 = vrot.slane %v807, 3
        %v827 = vrot.slane %v808, 3
        %v828 = vsel %vm825, %v826, %v827
        %v829 = vrot.slane %v809, 3
        %v830 = vsel %vm825, %v827, %v829
        %v831 = vrot.slane %v810, 3
        %v832 = vsel %vm825, %v826, %v831
        %v833 = vrot.slane %v811, 3
        %v834 = vsel %vm825, %v831, %v833
        %v835 = vrot.slane %v812, 3
        %v836 = vsel %vm825, %v826, %v835
        %v837 = vrot.slane %v813, 3
        %v838 = vsel %vm825, %v835, %v837
        %v839 = vrot.slane %v814, 3
        %v840 = vsel %vm825, %v826, %v839
        %v841 = vrot.slane %v815, 3
        %v842 = vsel %vm825, %v839, %v841
        %v851 = vadd.f32 %v795, %v828
        %v852 = vadd.f32 %v796, %v830
        %v853 = vadd.f32 %v797, %v832
        %v854 = vadd.f32 %v798, %v834
        %v855 = vadd.f32 %v799, %v836
        %v856 = vadd.f32 %v800, %v838
        %v857 = vadd.f32 %v801, %v840
        %v858 = vadd.f32 %v802, %v842
        %v859 = vlaneseq
        %v860 = vshrl.u32 %v859, 7
        %v861 = vsub.s32 4, %v860
        %v862 = vrot.slane %v674, %v861
        %v863 = vmul.f32 %v862, 0.0
        %v864 = vmul.f32 %v666, %v862
        %v865 = vmul.f32 %v644, %v862
        %v866 = vmul.f32 %v667, %v862
        %v867 = vmul.f32 %v647, %v862
        %v868 = vmul.f32 %v668, %v862
        %v869 = vmul.f32 %v650, %v862
        %v870 = vmul.f32 %v669, %v862
        %v871 = vmul.f32 %v653, %v862
        %vm881 = vcmask 1043456
        %v882 = vrot.slane %v863, 4
        %v883 = vrot.slane %v864, 4
        %v884 = vsel %vm881, %v882, %v883
        %v885 = vrot.slane %v865, 4
        %v886 = vsel %vm881, %v883, %v885
        %v887 = vrot.slane %v866, 4
        %v888 = vsel %vm881, %v882, %v887
        %v889 = vrot.slane %v867, 4
        %v890 = vsel %vm881, %v887, %v889
        %v891 = vrot.slane %v868, 4
        %v892 = vsel %vm881, %v882, %v891
        %v893 = vrot.slane %v869, 4
        %v894 = vsel %vm881, %v891, %v893
        %v895 = vrot.slane %v870, 4
        %v896 = vsel %vm881, %v882, %v895
        %v897 = vrot.slane %v871, 4
        %v898 = vsel %vm881, %v895, %v897
        %v907 = vadd.f32 %v851, %v884
        %v908 = vadd.f32 %v852, %v886
        %v909 = vadd.f32 %v853, %v888
        %v910 = vadd.f32 %v854, %v890
        %v911 = vadd.f32 %v855, %v892
        %v912 = vadd.f32 %v856, %v894
        %v913 = vadd.f32 %v857, %v896
        %v914 = vadd.f32 %v858, %v898
        %v915 = vlaneseq
        %v916 = vshrl.u32 %v915, 7
        %v917 = vsub.s32 5, %v916
        %v918 = vrot.slane %v674, %v917
        %v919 = vmul.f32 %v918, 0.0
        %v920 = vmul.f32 %v666, %v918
        %v921 = vmul.f32 %v644, %v918
        %v922 = vmul.f32 %v667, %v918
        %v923 = vmul.f32 %v647, %v918
        %v924 = vmul.f32 %v668, %v918
        %v925 = vmul.f32 %v650, %v918
        %v926 = vmul.f32 %v669, %v918
        %v927 = vmul.f32 %v653, %v918
        %vm937 = vcmask 1042432
        %v938 = vrot.slane %v919, 5
        %v939 = vrot.slane %v920, 5
        %v940 = vsel %vm937, %v938, %v939
        %v941 = vrot.slane %v921, 5
        %v942 = vsel %vm937, %v939, %v941
        %v943 = vrot.slane %v922, 5
        %v944 = vsel %vm937, %v938, %v943
        %v945 = vrot.slane %v923, 5
        %v946 = vsel %vm937, %v943, %v945
        %v947 = vrot.slane %v924, 5
        %v948 = vsel %vm937, %v938, %v947
        %v949 = vrot.slane %v925, 5
        %v950 = vsel %vm937, %v947, %v949
        %v951 = vrot.slane %v926, 5
        %v952 = vsel %vm937, %v938, %v951
        %v953 = vrot.slane %v927, 5
        %v954 = vsel %vm937, %v951, %v953
        %v963 = vadd.f32 %v907, %v940
        %v964 = vadd.f32 %v908, %v942
        %v965 = vadd.f32 %v909, %v944
        %v966 = vadd.f32 %v910, %v946
        %v967 = vadd.f32 %v911, %v948
        %v968 = vadd.f32 %v912, %v950
        %v969 = vadd.f32 %v913, %v952
        %v970 = vadd.f32 %v914, %v954
        %v971 = vlaneseq
        %v972 = vshrl.u32 %v971, 7
        %v973 = vsub.s32 6, %v972
        %v974 = vrot.slane %v674, %v973
        %v975 = vmul.f32 %v974, 0.0
        %v976 = vmul.f32 %v666, %v974
        %v977 = vmul.f32 %v644, %v974
        %v978 = vmul.f32 %v667, %v974
        %v979 = vmul.f32 %v647, %v974
        %v980 = vmul.f32 %v668, %v974
        %v981 = vmul.f32 %v650, %v974
        %v982 = vmul.f32 %v669, %v974
        %v983 = vmul.f32 %v653, %v974
        %vm993 = vcmask 1041408
        %v994 = vrot.slane %v975, 6
        %v995 = vrot.slane %v976, 6
        %v996 = vsel %vm993, %v994, %v995
        %v997 = vrot.slane %v977, 6
        %v998 = vsel %vm993, %v995, %v997
        %v999 = vrot.slane %v978, 6
        %v1000 = vsel %vm993, %v994, %v999
        %v1001 = vrot.slane %v979, 6
        %v1002 = vsel %vm993, %v999, %v1001
        %v1003 = vrot.slane %v980, 6
        %v1004 = vsel %vm993, %v994, %v1003
        %v1005 = vrot.slane %v981, 6
        %v1006 = vsel %vm993, %v1003, %v1005
        %v1007 = vrot.slane %v982, 6
        %v1008 = vsel %vm993, %v994, %v1007
        %v1009 = vrot.slane %v983, 6
        %v1010 = vsel %vm993, %v1007, %v1009
        %v1019 = vadd.f32 %v963, %v996
        %v1020 = vadd.f32 %v964, %v998
        %v1021 = vadd.f32 %v965, %v1000
        %v1022 = vadd.f32 %v966, %v1002
        %v1023 = vadd.f32 %v967, %v1004
        %v1024 = vadd.f32 %v968, %v1006
        %v1025 = vadd.f32 %v969, %v1008
        %v1026 = vadd.f32 %v970, %v1010
        %v1027 = vlaneseq
        %v1028 = vshrl.u32 %v1027, 7
        %v1029 = vsub.s32 7, %v1028
        %v1030 = vrot.slane %v674, %v1029
        %v1031 = vmul.f32 %v1030, 0.0
        %v1032 = vmul.f32 %v666, %v1030
        %v1033 = vmul.f32 %v644, %v1030
        %v1034 = vmul.f32 %v667, %v1030
        %v1035 = vmul.f32 %v647, %v1030
        %v1036 = vmul.f32 %v668, %v1030
        %v1037 = vmul.f32 %v650, %v1030
        %v1038 = vmul.f32 %v669, %v1030
        %v1039 = vmul.f32 %v653, %v1030
        %vm1049 = vcmask 1040384
        %v1050 = vrot.slane %v1031, 7
        %v1051 = vrot.slane %v1032, 7
        %v1052 = vsel %vm1049, %v1050, %v1051
        %v1053 = vrot.slane %v1033, 7
        %v1054 = vsel %vm1049, %v1051, %v1053
        %v1055 = vrot.slane %v1034, 7
        %v1056 = vsel %vm1049, %v1050, %v1055
        %v1057 = vrot.slane %v1035, 7
        %v1058 = vsel %vm1049, %v1055, %v1057
        %v1059 = vrot.slane %v1036, 7
        %v1060 = vsel %vm1049, %v1050, %v1059
        %v1061 = vrot.slane %v1037, 7
        %v1062 = vsel %vm1049, %v1059, %v1061
        %v1063 = vrot.slane %v1038, 7
        %v1064 = vsel %vm1049, %v1050, %v1063
        %v1065 = vrot.slane %v1039, 7
        %v1066 = vsel %vm1049, %v1063, %v1065
        %v1075 = vadd.f32 %v1019, %v1052
        %v1076 = vadd.f32 %v1020, %v1054
        %v1077 = vadd.f32 %v1021, %v1056
        %v1078 = vadd.f32 %v1022, %v1058
        %v1079 = vadd.f32 %v1023, %v1060
        %v1080 = vadd.f32 %v1024, %v1062
        %v1081 = vadd.f32 %v1025, %v1064
        %v1082 = vadd.f32 %v1026, %v1066
        %v1083 = vlaneseq
        %v1084 = vshrl.u32 %v1083, 7
        %v1085 = vsub.s32 0, %v1084
        %v1086 = vrot.slane %v675, %v1085
        %v1087 = vmul.f32 %v666, %v1086
        %v1088 = vmul.f32 %v644, %v1086
        %v1089 = vmul.f32 %v667, %v1086
        %v1090 = vmul.f32 %v647, %v1086
        %v1091 = vmul.f32 %v668, %v1086
        %v1092 = vmul.f32 %v650, %v1086
        %v1093 = vmul.f32 %v669, %v1086
        %v1094 = vmul.f32 %v653, %v1086
        %v1095 = vadd.f32 %v1075, %v1087
        %v1096 = vadd.f32 %v1076, %v1088
        %v1097 = vadd.f32 %v1077, %v1089
        %v1098 = vadd.f32 %v1078, %v1090
        %v1099 = vadd.f32 %v1079, %v1091
        %v1100 = vadd.f32 %v1080, %v1092
        %v1101 = vadd.f32 %v1081, %v1093
        %v1102 = vadd.f32 %v1082, %v1094
        %v1103 = vlaneseq
        %v1104 = vshrl.u32 %v1103, 7
        %v1105 = vsub.s32 1, %v1104
        %v1106 = vrot.slane %v675, %v1105
        %v1107 = vmul.f32 %v666, %v1106
        %v1108 = vmul.f32 %v644, %v1106
        %v1109 = vmul.f32 %v670, %v1106
        %v1110 = vmul.f32 %v667, %v1106
        %v1111 = vmul.f32 %v647, %v1106
        %v1112 = vmul.f32 %v671, %v1106
        %v1113 = vmul.f32 %v668, %v1106
        %v1114 = vmul.f32 %v650, %v1106
        %v1115 = vmul.f32 %v672, %v1106
        %v1116 = vmul.f32 %v669, %v1106
        %v1117 = vmul.f32 %v653, %v1106
        %v1118 = vmul.f32 %v673, %v1106
        %v1131 = vrot.slane %v1107, 1
        %v1132 = vrot.slane %v1108, 1
        %v1133 = vsel %vm641, %v1131, %v1132
        %v1134 = vrot.slane %v1109, 1
        %v1135 = vsel %vm641, %v1132, %v1134
        %v1136 = vrot.slane %v1110, 1
        %v1137 = vrot.slane %v1111, 1
        %v1138 = vsel %vm641, %v1136, %v1137
        %v1139 = vrot.slane %v1112, 1
        %v1140 = vsel %vm641, %v1137, %v1139
        %v1141 = vrot.slane %v1113, 1
        %v1142 = vrot.slane %v1114, 1
        %v1143 = vsel %vm641, %v1141, %v1142
        %v1144 = vrot.slane %v1115, 1
        %v1145 = vsel %vm641, %v1142, %v1144
        %v1146 = vrot.slane %v1116, 1
        %v1147 = vrot.slane %v1117, 1
        %v1148 = vsel %vm641, %v1146, %v1147
        %v1149 = vrot.slane %v1118, 1
        %v1150 = vsel %vm641, %v1147, %v1149
        %v1159 = vadd.f32 %v1095, %v1133
        %v1160 = vadd.f32 %v1096, %v1135
        %v1161 = vadd.f32 %v1097, %v1138
        %v1162 = vadd.f32 %v1098, %v1140
        %v1163 = vadd.f32 %v1099, %v1143
        %v1164 = vadd.f32 %v1100, %v1145
        %v1165 = vadd.f32 %v1101, %v1148
        %v1166 = vadd.f32 %v1102, %v1150
        %v1167 = vlaneseq
        %v1168 = vshrl.u32 %v1167, 7
        %v1169 = vsub.s32 2, %v1168
        %v1170 = vrot.slane %v675, %v1169
        %v1171 = vmul.f32 %v666, %v1170
        %v1172 = vmul.f32 %v644, %v1170
        %v1173 = vmul.f32 %v670, %v1170
        %v1174 = vmul.f32 %v667, %v1170
        %v1175 = vmul.f32 %v647, %v1170
        %v1176 = vmul.f32 %v671, %v1170
        %v1177 = vmul.f32 %v668, %v1170
        %v1178 = vmul.f32 %v650, %v1170
        %v1179 = vmul.f32 %v672, %v1170
        %v1180 = vmul.f32 %v669, %v1170
        %v1181 = vmul.f32 %v653, %v1170
        %v1182 = vmul.f32 %v673, %v1170
        %v1195 = vrot.slane %v1171, 2
        %v1196 = vrot.slane %v1172, 2
        %v1197 = vsel %vm769, %v1195, %v1196
        %v1198 = vrot.slane %v1173, 2
        %v1199 = vsel %vm769, %v1196, %v1198
        %v1200 = vrot.slane %v1174, 2
        %v1201 = vrot.slane %v1175, 2
        %v1202 = vsel %vm769, %v1200, %v1201
        %v1203 = vrot.slane %v1176, 2
        %v1204 = vsel %vm769, %v1201, %v1203
        %v1205 = vrot.slane %v1177, 2
        %v1206 = vrot.slane %v1178, 2
        %v1207 = vsel %vm769, %v1205, %v1206
        %v1208 = vrot.slane %v1179, 2
        %v1209 = vsel %vm769, %v1206, %v1208
        %v1210 = vrot.slane %v1180, 2
        %v1211 = vrot.slane %v1181, 2
        %v1212 = vsel %vm769, %v1210, %v1211
        %v1213 = vrot.slane %v1182, 2
        %v1214 = vsel %vm769, %v1211, %v1213
        %v1223 = vadd.f32 %v1159, %v1197
        %v1224 = vadd.f32 %v1160, %v1199
        %v1225 = vadd.f32 %v1161, %v1202
        %v1226 = vadd.f32 %v1162, %v1204
        %v1227 = vadd.f32 %v1163, %v1207
        %v1228 = vadd.f32 %v1164, %v1209
        %v1229 = vadd.f32 %v1165, %v1212
        %v1230 = vadd.f32 %v1166, %v1214
        %v1231 = vlaneseq
        %v1232 = vshrl.u32 %v1231, 7
        %v1233 = vsub.s32 3, %v1232
        %v1234 = vrot.slane %v675, %v1233
        %v1235 = vmul.f32 %v666, %v1234
        %v1236 = vmul.f32 %v644, %v1234
        %v1237 = vmul.f32 %v670, %v1234
        %v1238 = vmul.f32 %v667, %v1234
        %v1239 = vmul.f32 %v647, %v1234
        %v1240 = vmul.f32 %v671, %v1234
        %v1241 = vmul.f32 %v668, %v1234
        %v1242 = vmul.f32 %v650, %v1234
        %v1243 = vmul.f32 %v672, %v1234
        %v1244 = vmul.f32 %v669, %v1234
        %v1245 = vmul.f32 %v653, %v1234
        %v1246 = vmul.f32 %v673, %v1234
        %v1259 = vrot.slane %v1235, 3
        %v1260 = vrot.slane %v1236, 3
        %v1261 = vsel %vm825, %v1259, %v1260
        %v1262 = vrot.slane %v1237, 3
        %v1263 = vsel %vm825, %v1260, %v1262
        %v1264 = vrot.slane %v1238, 3
        %v1265 = vrot.slane %v1239, 3
        %v1266 = vsel %vm825, %v1264, %v1265
        %v1267 = vrot.slane %v1240, 3
        %v1268 = vsel %vm825, %v1265, %v1267
        %v1269 = vrot.slane %v1241, 3
        %v1270 = vrot.slane %v1242, 3
        %v1271 = vsel %vm825, %v1269, %v1270
        %v1272 = vrot.slane %v1243, 3
        %v1273 = vsel %vm825, %v1270, %v1272
        %v1274 = vrot.slane %v1244, 3
        %v1275 = vrot.slane %v1245, 3
        %v1276 = vsel %vm825, %v1274, %v1275
        %v1277 = vrot.slane %v1246, 3
        %v1278 = vsel %vm825, %v1275, %v1277
        %v1287 = vadd.f32 %v1223, %v1261
        %v1288 = vadd.f32 %v1224, %v1263
        %v1289 = vadd.f32 %v1225, %v1266
        %v1290 = vadd.f32 %v1226, %v1268
        %v1291 = vadd.f32 %v1227, %v1271
        %v1292 = vadd.f32 %v1228, %v1273
        %v1293 = vadd.f32 %v1229, %v1276
        %v1294 = vadd.f32 %v1230, %v1278
        %v1295 = vlaneseq
        %v1296 = vshrl.u32 %v1295, 7
        %v1297 = vsub.s32 4, %v1296
        %v1298 = vrot.slane %v675, %v1297
        %v1299 = vmul.f32 %v666, %v1298
        %v1300 = vmul.f32 %v644, %v1298
        %v1301 = vmul.f32 %v670, %v1298
        %v1302 = vmul.f32 %v667, %v1298
        %v1303 = vmul.f32 %v647, %v1298
        %v1304 = vmul.f32 %v671, %v1298
        %v1305 = vmul.f32 %v668, %v1298
        %v1306 = vmul.f32 %v650, %v1298
        %v1307 = vmul.f32 %v672, %v1298
        %v1308 = vmul.f32 %v669, %v1298
        %v1309 = vmul.f32 %v653, %v1298
        %v1310 = vmul.f32 %v673, %v1298
        %v1323 = vrot.slane %v1299, 4
        %v1324 = vrot.slane %v1300, 4
        %v1325 = vsel %vm881, %v1323, %v1324
        %v1326 = vrot.slane %v1301, 4
        %v1327 = vsel %vm881, %v1324, %v1326
        %v1328 = vrot.slane %v1302, 4
        %v1329 = vrot.slane %v1303, 4
        %v1330 = vsel %vm881, %v1328, %v1329
        %v1331 = vrot.slane %v1304, 4
        %v1332 = vsel %vm881, %v1329, %v1331
        %v1333 = vrot.slane %v1305, 4
        %v1334 = vrot.slane %v1306, 4
        %v1335 = vsel %vm881, %v1333, %v1334
        %v1336 = vrot.slane %v1307, 4
        %v1337 = vsel %vm881, %v1334, %v1336
        %v1338 = vrot.slane %v1308, 4
        %v1339 = vrot.slane %v1309, 4
        %v1340 = vsel %vm881, %v1338, %v1339
        %v1341 = vrot.slane %v1310, 4
        %v1342 = vsel %vm881, %v1339, %v1341
        %v1351 = vadd.f32 %v1287, %v1325
        %v1352 = vadd.f32 %v1288, %v1327
        %v1353 = vadd.f32 %v1289, %v1330
        %v1354 = vadd.f32 %v1290, %v1332
        %v1355 = vadd.f32 %v1291, %v1335
        %v1356 = vadd.f32 %v1292, %v1337
        %v1357 = vadd.f32 %v1293, %v1340
        %v1358 = vadd.f32 %v1294, %v1342
        %v1359 = vlaneseq
        %v1360 = vshrl.u32 %v1359, 7
        %v1361 = vsub.s32 5, %v1360
        %v1362 = vrot.slane %v675, %v1361
        %v1363 = vmul.f32 %v666, %v1362
        %v1364 = vmul.f32 %v644, %v1362
        %v1365 = vmul.f32 %v670, %v1362
        %v1366 = vmul.f32 %v667, %v1362
        %v1367 = vmul.f32 %v647, %v1362
        %v1368 = vmul.f32 %v671, %v1362
        %v1369 = vmul.f32 %v668, %v1362
        %v1370 = vmul.f32 %v650, %v1362
        %v1371 = vmul.f32 %v672, %v1362
        %v1372 = vmul.f32 %v669, %v1362
        %v1373 = vmul.f32 %v653, %v1362
        %v1374 = vmul.f32 %v673, %v1362
        %v1387 = vrot.slane %v1363, 5
        %v1388 = vrot.slane %v1364, 5
        %v1389 = vsel %vm937, %v1387, %v1388
        %v1390 = vrot.slane %v1365, 5
        %v1391 = vsel %vm937, %v1388, %v1390
        %v1392 = vrot.slane %v1366, 5
        %v1393 = vrot.slane %v1367, 5
        %v1394 = vsel %vm937, %v1392, %v1393
        %v1395 = vrot.slane %v1368, 5
        %v1396 = vsel %vm937, %v1393, %v1395
        %v1397 = vrot.slane %v1369, 5
        %v1398 = vrot.slane %v1370, 5
        %v1399 = vsel %vm937, %v1397, %v1398
        %v1400 = vrot.slane %v1371, 5
        %v1401 = vsel %vm937, %v1398, %v1400
        %v1402 = vrot.slane %v1372, 5
        %v1403 = vrot.slane %v1373, 5
        %v1404 = vsel %vm937, %v1402, %v1403
        %v1405 = vrot.slane %v1374, 5
        %v1406 = vsel %vm937, %v1403, %v1405
        %v1415 = vadd.f32 %v1351, %v1389
        %v1416 = vadd.f32 %v1352, %v1391
        %v1417 = vadd.f32 %v1353, %v1394
        %v1418 = vadd.f32 %v1354, %v1396
        %v1419 = vadd.f32 %v1355, %v1399
        %v1420 = vadd.f32 %v1356, %v1401
        %v1421 = vadd.f32 %v1357, %v1404
        %v1422 = vadd.f32 %v1358, %v1406
        %v1423 = vlaneseq
        %v1424 = vshrl.u32 %v1423, 7
        %v1425 = vsub.s32 6, %v1424
        %v1426 = vrot.slane %v675, %v1425
        %v1427 = vmul.f32 %v666, %v1426
        %v1428 = vmul.f32 %v644, %v1426
        %v1429 = vmul.f32 %v670, %v1426
        %v1430 = vmul.f32 %v667, %v1426
        %v1431 = vmul.f32 %v647, %v1426
        %v1432 = vmul.f32 %v671, %v1426
        %v1433 = vmul.f32 %v668, %v1426
        %v1434 = vmul.f32 %v650, %v1426
        %v1435 = vmul.f32 %v672, %v1426
        %v1436 = vmul.f32 %v669, %v1426
        %v1437 = vmul.f32 %v653, %v1426
        %v1438 = vmul.f32 %v673, %v1426
        %v1451 = vrot.slane %v1427, 6
        %v1452 = vrot.slane %v1428, 6
        %v1453 = vsel %vm993, %v1451, %v1452
        %v1454 = vrot.slane %v1429, 6
        %v1455 = vsel %vm993, %v1452, %v1454
        %v1456 = vrot.slane %v1430, 6
        %v1457 = vrot.slane %v1431, 6
        %v1458 = vsel %vm993, %v1456, %v1457
        %v1459 = vrot.slane %v1432, 6
        %v1460 = vsel %vm993, %v1457, %v1459
        %v1461 = vrot.slane %v1433, 6
        %v1462 = vrot.slane %v1434, 6
        %v1463 = vsel %vm993, %v1461, %v1462
        %v1464 = vrot.slane %v1435, 6
        %v1465 = vsel %vm993, %v1462, %v1464
        %v1466 = vrot.slane %v1436, 6
        %v1467 = vrot.slane %v1437, 6
        %v1468 = vsel %vm993, %v1466, %v1467
        %v1469 = vrot.slane %v1438, 6
        %v1470 = vsel %vm993, %v1467, %v1469
        %v1479 = vadd.f32 %v1415, %v1453
        %v1480 = vadd.f32 %v1416, %v1455
        %v1481 = vadd.f32 %v1417, %v1458
        %v1482 = vadd.f32 %v1418, %v1460
        %v1483 = vadd.f32 %v1419, %v1463
        %v1484 = vadd.f32 %v1420, %v1465
        %v1485 = vadd.f32 %v1421, %v1468
        %v1486 = vadd.f32 %v1422, %v1470
        %v1487 = vlaneseq
        %v1488 = vshrl.u32 %v1487, 7
        %v1489 = vsub.s32 7, %v1488
        %v1490 = vrot.slane %v675, %v1489
        %v1491 = vmul.f32 %v666, %v1490
        %v1492 = vmul.f32 %v644, %v1490
        %v1493 = vmul.f32 %v670, %v1490
        %v1494 = vmul.f32 %v667, %v1490
        %v1495 = vmul.f32 %v647, %v1490
        %v1496 = vmul.f32 %v671, %v1490
        %v1497 = vmul.f32 %v668, %v1490
        %v1498 = vmul.f32 %v650, %v1490
        %v1499 = vmul.f32 %v672, %v1490
        %v1500 = vmul.f32 %v669, %v1490
        %v1501 = vmul.f32 %v653, %v1490
        %v1502 = vmul.f32 %v673, %v1490
        %v1515 = vrot.slane %v1491, 7
        %v1516 = vrot.slane %v1492, 7
        %v1517 = vsel %vm1049, %v1515, %v1516
        %v1518 = vrot.slane %v1493, 7
        %v1519 = vsel %vm1049, %v1516, %v1518
        %v1520 = vrot.slane %v1494, 7
        %v1521 = vrot.slane %v1495, 7
        %v1522 = vsel %vm1049, %v1520, %v1521
        %v1523 = vrot.slane %v1496, 7
        %v1524 = vsel %vm1049, %v1521, %v1523
        %v1525 = vrot.slane %v1497, 7
        %v1526 = vrot.slane %v1498, 7
        %v1527 = vsel %vm1049, %v1525, %v1526
        %v1528 = vrot.slane %v1499, 7
        %v1529 = vsel %vm1049, %v1526, %v1528
        %v1530 = vrot.slane %v1500, 7
        %v1531 = vrot.slane %v1501, 7
        %v1532 = vsel %vm1049, %v1530, %v1531
        %v1533 = vrot.slane %v1502, 7
        %v1534 = vsel %vm1049, %v1531, %v1533
        %v1543 = vadd.f32 %v1479, %v1517
        %v1544 = vadd.f32 %v1480, %v1519
        %v1545 = vadd.f32 %v1481, %v1522
        %v1546 = vadd.f32 %v1482, %v1524
        %v1547 = vadd.f32 %v1483, %v1527
        %v1548 = vadd.f32 %v1484, %v1529
        %v1549 = vadd.f32 %v1485, %v1532
        %v1550 = vadd.f32 %v1486, %v1534
        %v1551 = vlaneseq
        %v1552 = vshrl.u32 %v1551, 7
        %v1553 = vsub.s32 0, %v1552
        %v1554 = vrot.slane %v676, %v1553
        %v1555 = vmul.f32 %v644, %v1554
        %v1556 = vmul.f32 %v670, %v1554
        %v1557 = vmul.f32 %v647, %v1554
        %v1558 = vmul.f32 %v671, %v1554
        %v1559 = vmul.f32 %v650, %v1554
        %v1560 = vmul.f32 %v672, %v1554
        %v1561 = vmul.f32 %v653, %v1554
        %v1562 = vmul.f32 %v673, %v1554
        %v1563 = vadd.f32 %v1543, %v1555
        %v1564 = vadd.f32 %v1544, %v1556
        %v1565 = vadd.f32 %v1545, %v1557
        %v1566 = vadd.f32 %v1546, %v1558
        %v1567 = vadd.f32 %v1547, %v1559
        %v1568 = vadd.f32 %v1548, %v1560
        %v1569 = vadd.f32 %v1549, %v1561
        %v1570 = vadd.f32 %v1550, %v1562
        %v1571 = vlaneseq
        %v1572 = vshrl.u32 %v1571, 7
        %v1573 = vsub.s32 1, %v1572
        %v1574 = vrot.slane %v676, %v1573
        %v1575 = vmul.f32 %v644, %v1574
        %v1576 = vmul.f32 %v670, %v1574
        %v1577 = vmul.f32 %v1574, 0.0
        %v1578 = vmul.f32 %v647, %v1574
        %v1579 = vmul.f32 %v671, %v1574
        %v1580 = vmul.f32 %v650, %v1574
        %v1581 = vmul.f32 %v672, %v1574
        %v1582 = vmul.f32 %v653, %v1574
        %v1583 = vmul.f32 %v673, %v1574
        %v1593 = vrot.slane %v1575, 1
        %v1594 = vrot.slane %v1576, 1
        %v1595 = vsel %vm641, %v1593, %v1594
        %v1596 = vrot.slane %v1577, 1
        %v1597 = vsel %vm641, %v1594, %v1596
        %v1598 = vrot.slane %v1578, 1
        %v1599 = vrot.slane %v1579, 1
        %v1600 = vsel %vm641, %v1598, %v1599
        %v1601 = vsel %vm641, %v1599, %v1596
        %v1602 = vrot.slane %v1580, 1
        %v1603 = vrot.slane %v1581, 1
        %v1604 = vsel %vm641, %v1602, %v1603
        %v1605 = vsel %vm641, %v1603, %v1596
        %v1606 = vrot.slane %v1582, 1
        %v1607 = vrot.slane %v1583, 1
        %v1608 = vsel %vm641, %v1606, %v1607
        %v1609 = vsel %vm641, %v1607, %v1596
        %v1618 = vadd.f32 %v1563, %v1595
        %v1619 = vadd.f32 %v1564, %v1597
        %v1620 = vadd.f32 %v1565, %v1600
        %v1621 = vadd.f32 %v1566, %v1601
        %v1622 = vadd.f32 %v1567, %v1604
        %v1623 = vadd.f32 %v1568, %v1605
        %v1624 = vadd.f32 %v1569, %v1608
        %v1625 = vadd.f32 %v1570, %v1609
        %v1626 = vlaneseq
        %v1627 = vshrl.u32 %v1626, 7
        %v1628 = vsub.s32 2, %v1627
        %v1629 = vrot.slane %v676, %v1628
        %v1630 = vmul.f32 %v644, %v1629
        %v1631 = vmul.f32 %v670, %v1629
        %v1632 = vmul.f32 %v1629, 0.0
        %v1633 = vmul.f32 %v647, %v1629
        %v1634 = vmul.f32 %v671, %v1629
        %v1635 = vmul.f32 %v650, %v1629
        %v1636 = vmul.f32 %v672, %v1629
        %v1637 = vmul.f32 %v653, %v1629
        %v1638 = vmul.f32 %v673, %v1629
        %v1648 = vrot.slane %v1630, 2
        %v1649 = vrot.slane %v1631, 2
        %v1650 = vsel %vm769, %v1648, %v1649
        %v1651 = vrot.slane %v1632, 2
        %v1652 = vsel %vm769, %v1649, %v1651
        %v1653 = vrot.slane %v1633, 2
        %v1654 = vrot.slane %v1634, 2
        %v1655 = vsel %vm769, %v1653, %v1654
        %v1656 = vsel %vm769, %v1654, %v1651
        %v1657 = vrot.slane %v1635, 2
        %v1658 = vrot.slane %v1636, 2
        %v1659 = vsel %vm769, %v1657, %v1658
        %v1660 = vsel %vm769, %v1658, %v1651
        %v1661 = vrot.slane %v1637, 2
        %v1662 = vrot.slane %v1638, 2
        %v1663 = vsel %vm769, %v1661, %v1662
        %v1664 = vsel %vm769, %v1662, %v1651
        %v1673 = vadd.f32 %v1618, %v1650
        %v1674 = vadd.f32 %v1619, %v1652
        %v1675 = vadd.f32 %v1620, %v1655
        %v1676 = vadd.f32 %v1621, %v1656
        %v1677 = vadd.f32 %v1622, %v1659
        %v1678 = vadd.f32 %v1623, %v1660
        %v1679 = vadd.f32 %v1624, %v1663
        %v1680 = vadd.f32 %v1625, %v1664
        %v1681 = vlaneseq
        %v1682 = vshrl.u32 %v1681, 7
        %v1683 = vsub.s32 3, %v1682
        %v1684 = vrot.slane %v676, %v1683
        %v1685 = vmul.f32 %v644, %v1684
        %v1686 = vmul.f32 %v670, %v1684
        %v1687 = vmul.f32 %v1684, 0.0
        %v1688 = vmul.f32 %v647, %v1684
        %v1689 = vmul.f32 %v671, %v1684
        %v1690 = vmul.f32 %v650, %v1684
        %v1691 = vmul.f32 %v672, %v1684
        %v1692 = vmul.f32 %v653, %v1684
        %v1693 = vmul.f32 %v673, %v1684
        %v1703 = vrot.slane %v1685, 3
        %v1704 = vrot.slane %v1686, 3
        %v1705 = vsel %vm825, %v1703, %v1704
        %v1706 = vrot.slane %v1687, 3
        %v1707 = vsel %vm825, %v1704, %v1706
        %v1708 = vrot.slane %v1688, 3
        %v1709 = vrot.slane %v1689, 3
        %v1710 = vsel %vm825, %v1708, %v1709
        %v1711 = vsel %vm825, %v1709, %v1706
        %v1712 = vrot.slane %v1690, 3
        %v1713 = vrot.slane %v1691, 3
        %v1714 = vsel %vm825, %v1712, %v1713
        %v1715 = vsel %vm825, %v1713, %v1706
        %v1716 = vrot.slane %v1692, 3
        %v1717 = vrot.slane %v1693, 3
        %v1718 = vsel %vm825, %v1716, %v1717
        %v1719 = vsel %vm825, %v1717, %v1706
        %v1728 = vadd.f32 %v1673, %v1705
        %v1729 = vadd.f32 %v1674, %v1707
        %v1730 = vadd.f32 %v1675, %v1710
        %v1731 = vadd.f32 %v1676, %v1711
        %v1732 = vadd.f32 %v1677, %v1714
        %v1733 = vadd.f32 %v1678, %v1715
        %v1734 = vadd.f32 %v1679, %v1718
        %v1735 = vadd.f32 %v1680, %v1719
        %v1736 = vlaneseq
        %v1737 = vshrl.u32 %v1736, 7
        %v1738 = vsub.s32 4, %v1737
        %v1739 = vrot.slane %v676, %v1738
        %v1740 = vmul.f32 %v644, %v1739
        %v1741 = vmul.f32 %v670, %v1739
        %v1742 = vmul.f32 %v1739, 0.0
        %v1743 = vmul.f32 %v647, %v1739
        %v1744 = vmul.f32 %v671, %v1739
        %v1745 = vmul.f32 %v650, %v1739
        %v1746 = vmul.f32 %v672, %v1739
        %v1747 = vmul.f32 %v653, %v1739
        %v1748 = vmul.f32 %v673, %v1739
        %v1758 = vrot.slane %v1740, 4
        %v1759 = vrot.slane %v1741, 4
        %v1760 = vsel %vm881, %v1758, %v1759
        %v1761 = vrot.slane %v1742, 4
        %v1762 = vsel %vm881, %v1759, %v1761
        %v1763 = vrot.slane %v1743, 4
        %v1764 = vrot.slane %v1744, 4
        %v1765 = vsel %vm881, %v1763, %v1764
        %v1766 = vsel %vm881, %v1764, %v1761
        %v1767 = vrot.slane %v1745, 4
        %v1768 = vrot.slane %v1746, 4
        %v1769 = vsel %vm881, %v1767, %v1768
        %v1770 = vsel %vm881, %v1768, %v1761
        %v1771 = vrot.slane %v1747, 4
        %v1772 = vrot.slane %v1748, 4
        %v1773 = vsel %vm881, %v1771, %v1772
        %v1774 = vsel %vm881, %v1772, %v1761
        %v1783 = vadd.f32 %v1728, %v1760
        %v1784 = vadd.f32 %v1729, %v1762
        %v1785 = vadd.f32 %v1730, %v1765
        %v1786 = vadd.f32 %v1731, %v1766
        %v1787 = vadd.f32 %v1732, %v1769
        %v1788 = vadd.f32 %v1733, %v1770
        %v1789 = vadd.f32 %v1734, %v1773
        %v1790 = vadd.f32 %v1735, %v1774
        %v1791 = vlaneseq
        %v1792 = vshrl.u32 %v1791, 7
        %v1793 = vsub.s32 5, %v1792
        %v1794 = vrot.slane %v676, %v1793
        %v1795 = vmul.f32 %v644, %v1794
        %v1796 = vmul.f32 %v670, %v1794
        %v1797 = vmul.f32 %v1794, 0.0
        %v1798 = vmul.f32 %v647, %v1794
        %v1799 = vmul.f32 %v671, %v1794
        %v1800 = vmul.f32 %v650, %v1794
        %v1801 = vmul.f32 %v672, %v1794
        %v1802 = vmul.f32 %v653, %v1794
        %v1803 = vmul.f32 %v673, %v1794
        %v1813 = vrot.slane %v1795, 5
        %v1814 = vrot.slane %v1796, 5
        %v1815 = vsel %vm937, %v1813, %v1814
        %v1816 = vrot.slane %v1797, 5
        %v1817 = vsel %vm937, %v1814, %v1816
        %v1818 = vrot.slane %v1798, 5
        %v1819 = vrot.slane %v1799, 5
        %v1820 = vsel %vm937, %v1818, %v1819
        %v1821 = vsel %vm937, %v1819, %v1816
        %v1822 = vrot.slane %v1800, 5
        %v1823 = vrot.slane %v1801, 5
        %v1824 = vsel %vm937, %v1822, %v1823
        %v1825 = vsel %vm937, %v1823, %v1816
        %v1826 = vrot.slane %v1802, 5
        %v1827 = vrot.slane %v1803, 5
        %v1828 = vsel %vm937, %v1826, %v1827
        %v1829 = vsel %vm937, %v1827, %v1816
        %v1838 = vadd.f32 %v1783, %v1815
        %v1839 = vadd.f32 %v1784, %v1817
        %v1840 = vadd.f32 %v1785, %v1820
        %v1841 = vadd.f32 %v1786, %v1821
        %v1842 = vadd.f32 %v1787, %v1824
        %v1843 = vadd.f32 %v1788, %v1825
        %v1844 = vadd.f32 %v1789, %v1828
        %v1845 = vadd.f32 %v1790, %v1829
        %v1846 = vlaneseq
        %v1847 = vshrl.u32 %v1846, 7
        %v1848 = vsub.s32 6, %v1847
        %v1849 = vrot.slane %v676, %v1848
        %v1850 = vmul.f32 %v644, %v1849
        %v1851 = vmul.f32 %v670, %v1849
        %v1852 = vmul.f32 %v1849, 0.0
        %v1853 = vmul.f32 %v647, %v1849
        %v1854 = vmul.f32 %v671, %v1849
        %v1855 = vmul.f32 %v650, %v1849
        %v1856 = vmul.f32 %v672, %v1849
        %v1857 = vmul.f32 %v653, %v1849
        %v1858 = vmul.f32 %v673, %v1849
        %v1868 = vrot.slane %v1850, 6
        %v1869 = vrot.slane %v1851, 6
        %v1870 = vsel %vm993, %v1868, %v1869
        %v1871 = vrot.slane %v1852, 6
        %v1872 = vsel %vm993, %v1869, %v1871
        %v1873 = vrot.slane %v1853, 6
        %v1874 = vrot.slane %v1854, 6
        %v1875 = vsel %vm993, %v1873, %v1874
        %v1876 = vsel %vm993, %v1874, %v1871
        %v1877 = vrot.slane %v1855, 6
        %v1878 = vrot.slane %v1856, 6
        %v1879 = vsel %vm993, %v1877, %v1878
        %v1880 = vsel %vm993, %v1878, %v1871
        %v1881 = vrot.slane %v1857, 6
        %v1882 = vrot.slane %v1858, 6
        %v1883 = vsel %vm993, %v1881, %v1882
        %v1884 = vsel %vm993, %v1882, %v1871
        %v1893 = vadd.f32 %v1838, %v1870
        %v1894 = vadd.f32 %v1839, %v1872
        %v1895 = vadd.f32 %v1840, %v1875
        %v1896 = vadd.f32 %v1841, %v1876
        %v1897 = vadd.f32 %v1842, %v1879
        %v1898 = vadd.f32 %v1843, %v1880
        %v1899 = vadd.f32 %v1844, %v1883
        %v1900 = vadd.f32 %v1845, %v1884
        %v1901 = vlaneseq
        %v1902 = vshrl.u32 %v1901, 7
        %v1903 = vsub.s32 7, %v1902
        %v1904 = vrot.slane %v676, %v1903
        %v1905 = vmul.f32 %v644, %v1904
        %v1906 = vmul.f32 %v670, %v1904
        %v1907 = vmul.f32 %v1904, 0.0
        %v1908 = vmul.f32 %v647, %v1904
        %v1909 = vmul.f32 %v671, %v1904
        %v1910 = vmul.f32 %v650, %v1904
        %v1911 = vmul.f32 %v672, %v1904
        %v1912 = vmul.f32 %v653, %v1904
        %v1913 = vmul.f32 %v673, %v1904
        %v1923 = vrot.slane %v1905, 7
        %v1924 = vrot.slane %v1906, 7
        %v1925 = vsel %vm1049, %v1923, %v1924
        %v1926 = vrot.slane %v1907, 7
        %v1927 = vsel %vm1049, %v1924, %v1926
        %v1928 = vrot.slane %v1908, 7
        %v1929 = vrot.slane %v1909, 7
        %v1930 = vsel %vm1049, %v1928, %v1929
        %v1931 = vsel %vm1049, %v1929, %v1926
        %v1932 = vrot.slane %v1910, 7
        %v1933 = vrot.slane %v1911, 7
        %v1934 = vsel %vm1049, %v1932, %v1933
        %v1935 = vsel %vm1049, %v1933, %v1926
        %v1936 = vrot.slane %v1912, 7
        %v1937 = vrot.slane %v1913, 7
        %v1938 = vsel %vm1049, %v1936, %v1937
        %v1939 = vsel %vm1049, %v1937, %v1926
        %v1948 = vadd.f32 %v1893, %v1925
        %v1949 = vadd.f32 %v1894, %v1927
        %v1950 = vadd.f32 %v1895, %v1930
        %v1951 = vadd.f32 %v1896, %v1931
        %v1952 = vadd.f32 %v1897, %v1934
        %v1953 = vadd.f32 %v1898, %v1935
        %v1954 = vadd.f32 %v1899, %v1938
        %v1955 = vadd.f32 %v1900, %v1939
        %v1956 = vlaneseq
        %v1957 = vshrl.u32 %v1956, 7
        %v1958 = vsub.s32 0, %v1957
        %v1959 = vrot.slane %v677, %v1958
        %v1960 = vmul.f32 %v670, %v1959
        %v1961 = vmul.f32 %v1959, 0.0
        %v1962 = vmul.f32 %v671, %v1959
        %v1963 = vmul.f32 %v672, %v1959
        %v1964 = vmul.f32 %v673, %v1959
        %v1965 = vadd.f32 %v1948, %v1960
        %v1966 = vadd.f32 %v1949, %v1961
        %v1967 = vadd.f32 %v1950, %v1962
        %v1968 = vadd.f32 %v1951, %v1961
        %v1969 = vadd.f32 %v1952, %v1963
        %v1970 = vadd.f32 %v1953, %v1961
        %v1971 = vadd.f32 %v1954, %v1964
        %v1972 = vadd.f32 %v1955, %v1961
        %v1973 = vlaneseq
        %v1974 = vshrl.u32 %v1973, 7
        %v1975 = vsub.s32 1, %v1974
        %v1976 = vrot.slane %v677, %v1975
        %v1977 = vmul.f32 %v670, %v1976
        %v1978 = vmul.f32 %v1976, 0.0
        %v1979 = vmul.f32 %v671, %v1976
        %v1980 = vmul.f32 %v672, %v1976
        %v1981 = vmul.f32 %v673, %v1976
        %v1987 = vrot.slane %v1977, 1
        %v1988 = vrot.slane %v1978, 1
        %v1989 = vsel %vm641, %v1987, %v1988
        %v1990 = vsel %vm641, %v1988, %v1988
        %v1991 = vrot.slane %v1979, 1
        %v1992 = vsel %vm641, %v1991, %v1988
        %v1993 = vrot.slane %v1980, 1
        %v1994 = vsel %vm641, %v1993, %v1988
        %v1995 = vrot.slane %v1981, 1
        %v1996 = vsel %vm641, %v1995, %v1988
        %v2002 = vadd.f32 %v1965, %v1989
        %v2003 = vadd.f32 %v1966, %v1990
        %v2004 = vadd.f32 %v1967, %v1992
        %v2005 = vadd.f32 %v1968, %v1990
        %v2006 = vadd.f32 %v1969, %v1994
        %v2007 = vadd.f32 %v1970, %v1990
        %v2008 = vadd.f32 %v1971, %v1996
        %v2009 = vadd.f32 %v1972, %v1990
        %v2010 = vlaneseq
        %v2011 = vshrl.u32 %v2010, 7
        %v2012 = vsub.s32 2, %v2011
        %v2013 = vrot.slane %v677, %v2012
        %v2014 = vmul.f32 %v670, %v2013
        %v2015 = vmul.f32 %v2013, 0.0
        %v2016 = vmul.f32 %v671, %v2013
        %v2017 = vmul.f32 %v672, %v2013
        %v2018 = vmul.f32 %v673, %v2013
        %v2024 = vrot.slane %v2014, 2
        %v2025 = vrot.slane %v2015, 2
        %v2026 = vsel %vm769, %v2024, %v2025
        %v2027 = vsel %vm769, %v2025, %v2025
        %v2028 = vrot.slane %v2016, 2
        %v2029 = vsel %vm769, %v2028, %v2025
        %v2030 = vrot.slane %v2017, 2
        %v2031 = vsel %vm769, %v2030, %v2025
        %v2032 = vrot.slane %v2018, 2
        %v2033 = vsel %vm769, %v2032, %v2025
        %v2039 = vadd.f32 %v2002, %v2026
        %v2040 = vadd.f32 %v2003, %v2027
        %v2041 = vadd.f32 %v2004, %v2029
        %v2042 = vadd.f32 %v2005, %v2027
        %v2043 = vadd.f32 %v2006, %v2031
        %v2044 = vadd.f32 %v2007, %v2027
        %v2045 = vadd.f32 %v2008, %v2033
        %v2046 = vadd.f32 %v2009, %v2027
        %v2047 = vlaneseq
        %v2048 = vshrl.u32 %v2047, 7
        %v2049 = vsub.s32 3, %v2048
        %v2050 = vrot.slane %v677, %v2049
        %v2051 = vmul.f32 %v670, %v2050
        %v2052 = vmul.f32 %v2050, 0.0
        %v2053 = vmul.f32 %v671, %v2050
        %v2054 = vmul.f32 %v672, %v2050
        %v2055 = vmul.f32 %v673, %v2050
        %v2061 = vrot.slane %v2051, 3
        %v2062 = vrot.slane %v2052, 3
        %v2063 = vsel %vm825, %v2061, %v2062
        %v2064 = vsel %vm825, %v2062, %v2062
        %v2065 = vrot.slane %v2053, 3
        %v2066 = vsel %vm825, %v2065, %v2062
        %v2067 = vrot.slane %v2054, 3
        %v2068 = vsel %vm825, %v2067, %v2062
        %v2069 = vrot.slane %v2055, 3
        %v2070 = vsel %vm825, %v2069, %v2062
        %v2076 = vadd.f32 %v2039, %v2063
        %v2077 = vadd.f32 %v2040, %v2064
        %v2078 = vadd.f32 %v2041, %v2066
        %v2079 = vadd.f32 %v2042, %v2064
        %v2080 = vadd.f32 %v2043, %v2068
        %v2081 = vadd.f32 %v2044, %v2064
        %v2082 = vadd.f32 %v2045, %v2070
        %v2083 = vadd.f32 %v2046, %v2064
        %v2084 = vlaneseq
        %v2085 = vshrl.u32 %v2084, 7
        %v2086 = vsub.s32 4, %v2085
        %v2087 = vrot.slane %v677, %v2086
        %v2088 = vmul.f32 %v670, %v2087
        %v2089 = vmul.f32 %v2087, 0.0
        %v2090 = vmul.f32 %v671, %v2087
        %v2091 = vmul.f32 %v672, %v2087
        %v2092 = vmul.f32 %v673, %v2087
        %v2098 = vrot.slane %v2088, 4
        %v2099 = vrot.slane %v2089, 4
        %v2100 = vsel %vm881, %v2098, %v2099
        %v2101 = vsel %vm881, %v2099, %v2099
        %v2102 = vrot.slane %v2090, 4
        %v2103 = vsel %vm881, %v2102, %v2099
        %v2104 = vrot.slane %v2091, 4
        %v2105 = vsel %vm881, %v2104, %v2099
        %v2106 = vrot.slane %v2092, 4
        %v2107 = vsel %vm881, %v2106, %v2099
        %v2113 = vadd.f32 %v2076, %v2100
        %v2114 = vadd.f32 %v2077, %v2101
        %v2115 = vadd.f32 %v2078, %v2103
        %v2116 = vadd.f32 %v2079, %v2101
        %v2117 = vadd.f32 %v2080, %v2105
        %v2118 = vadd.f32 %v2081, %v2101
        %v2119 = vadd.f32 %v2082, %v2107
        %v2120 = vadd.f32 %v2083, %v2101
        %v2121 = vlaneseq
        %v2122 = vshrl.u32 %v2121, 7
        %v2123 = vsub.s32 5, %v2122
        %v2124 = vrot.slane %v677, %v2123
        %v2125 = vmul.f32 %v670, %v2124
        %v2126 = vmul.f32 %v2124, 0.0
        %v2127 = vmul.f32 %v671, %v2124
        %v2128 = vmul.f32 %v672, %v2124
        %v2129 = vmul.f32 %v673, %v2124
        %v2135 = vrot.slane %v2125, 5
        %v2136 = vrot.slane %v2126, 5
        %v2137 = vsel %vm937, %v2135, %v2136
        %v2138 = vsel %vm937, %v2136, %v2136
        %v2139 = vrot.slane %v2127, 5
        %v2140 = vsel %vm937, %v2139, %v2136
        %v2141 = vrot.slane %v2128, 5
        %v2142 = vsel %vm937, %v2141, %v2136
        %v2143 = vrot.slane %v2129, 5
        %v2144 = vsel %vm937, %v2143, %v2136
        %v2150 = vadd.f32 %v2113, %v2137
        %v2151 = vadd.f32 %v2114, %v2138
        %v2152 = vadd.f32 %v2115, %v2140
        %v2153 = vadd.f32 %v2116, %v2138
        %v2154 = vadd.f32 %v2117, %v2142
        %v2155 = vadd.f32 %v2118, %v2138
        %v2156 = vadd.f32 %v2119, %v2144
        %v2157 = vadd.f32 %v2120, %v2138
        %v2158 = vlaneseq
        %v2159 = vshrl.u32 %v2158, 7
        %v2160 = vsub.s32 6, %v2159
        %v2161 = vrot.slane %v677, %v2160
        %v2162 = vmul.f32 %v670, %v2161
        %v2163 = vmul.f32 %v2161, 0.0
        %v2164 = vmul.f32 %v671, %v2161
        %v2165 = vmul.f32 %v672, %v2161
        %v2166 = vmul.f32 %v673, %v2161
        %v2172 = vrot.slane %v2162, 6
        %v2173 = vrot.slane %v2163, 6
        %v2174 = vsel %vm993, %v2172, %v2173
        %v2175 = vsel %vm993, %v2173, %v2173
        %v2176 = vrot.slane %v2164, 6
        %v2177 = vsel %vm993, %v2176, %v2173
        %v2178 = vrot.slane %v2165, 6
        %v2179 = vsel %vm993, %v2178, %v2173
        %v2180 = vrot.slane %v2166, 6
        %v2181 = vsel %vm993, %v2180, %v2173
        %v2187 = vadd.f32 %v2150, %v2174
        %v2188 = vadd.f32 %v2151, %v2175
        %v2189 = vadd.f32 %v2152, %v2177
        %v2190 = vadd.f32 %v2153, %v2175
        %v2191 = vadd.f32 %v2154, %v2179
        %v2192 = vadd.f32 %v2155, %v2175
        %v2193 = vadd.f32 %v2156, %v2181
        %v2194 = vadd.f32 %v2157, %v2175
        %v2195 = vld [vmem:[%s4] sm:$0x1]
        %v2197 = vlaneseq
        %v2198 = vshrl.u32 %v2197, 7
        %v2199 = vsub.s32 0, %v2198
        %v2200 = vrot.slane %v2195, %v2199
        %v2202 = vadd.f32 %v2187, %v2200
        %v2203 = vadd.f32 %v2188, %v2200
        %v2204 = vadd.f32 %v2189, %v2200
        %v2205 = vadd.f32 %v2190, %v2200
        %v2206 = vadd.f32 %v2191, %v2200
        %v2207 = vadd.f32 %v2192, %v2200
        %v2208 = vadd.f32 %v2193, %v2200
        %v2209 = vadd.f32 %v2194, %v2200
        %v2210 = vxor.u32 %v2202, 2147483648
        %v2211 = vxor.u32 %v2203, 2147483648
        %v2212 = vxor.u32 %v2204, 2147483648
        %v2213 = vxor.u32 %v2205, 2147483648
        %v2214 = vxor.u32 %v2206, 2147483648
        %v2215 = vxor.u32 %v2207, 2147483648
        %v2216 = vxor.u32 %v2208, 2147483648
        %v2217 = vxor.u32 %v2209, 2147483648
        %v2218 = vmul.f32 %v2210, 1.442695
        %v2219 = vpow.pop %v2218
        %v2220 = vmul.f32 %v2211, 1.442695
        %v2221 = vpow.pop %v2220
        %v2222 = vmul.f32 %v2212, 1.442695
        %v2223 = vpow.pop %v2222
        %v2224 = vmul.f32 %v2213, 1.442695
        %v2225 = vpow.pop %v2224
        %v2226 = vmul.f32 %v2214, 1.442695
        %v2227 = vpow.pop %v2226
        %v2228 = vmul.f32 %v2215, 1.442695
        %v2229 = vpow.pop %v2228
        %v2230 = vmul.f32 %v2216, 1.442695
        %v2231 = vpow.pop %v2230
        %v2232 = vmul.f32 %v2217, 1.442695
        %v2233 = vpow.pop %v2232
        %v2234 = vadd.f32 %v2219, 1.0
        %v2235 = vadd.f32 %v2221, 1.0
        %v2236 = vadd.f32 %v2223, 1.0
        %v2237 = vadd.f32 %v2225, 1.0
        %v2238 = vadd.f32 %v2227, 1.0
        %v2239 = vadd.f32 %v2229, 1.0
        %v2240 = vadd.f32 %v2231, 1.0
        %v2241 = vadd.f32 %v2233, 1.0
        %v2242 = vrcp.pop %v2234
        %v2243 = vmul.f32 1.0, %v2242
        %v2244 = vrcp.pop %v2235
        %v2245 = vmul.f32 1.0, %v2244
        %v2246 = vrcp.pop %v2236
        %v2247 = vmul.f32 1.0, %v2246
        %v2248 = vrcp.pop %v2237
        %v2249 = vmul.f32 1.0, %v2248
        %v2250 = vrcp.pop %v2238
        %v2251 = vmul.f32 1.0, %v2250
        %v2252 = vrcp.pop %v2239
        %v2253 = vmul.f32 1.0, %v2252
        %v2254 = vrcp.pop %v2240
        %v2255 = vmul.f32 1.0, %v2254
        %v2256 = vrcp.pop %v2241
        %v2257 = vmul.f32 1.0, %v2256
        %v2258 = vmul.f32 %v2202, %v2243
        %v2259 = vmul.f32 %v2203, %v2245
        %v2260 = vmul.f32 %v2204, %v2247
        %v2261 = vmul.f32 %v2205, %v2249
        %v2262 = vmul.f32 %v2206, %v2251
        %v2263 = vmul.f32 %v2207, %v2253
        %v2264 = vmul.f32 %v2208, %v2255
        %v2265 = vmul.f32 %v2209, %v2257
        %v2266 = vld [vmem:[%s5] sm:$0xff]
        %v2267 = vld [vmem:[%s5 + $0x8] sm:$0xff]
        %v2268 = vld [vmem:[%s5 + $0x10] sm:$0xff]
        %v2269 = vld [vmem:[%s5 + $0x18] sm:$0xff]
        %v2270 = vld [vmem:[%s5 + $0x20] sm:$0xff]
        %v2271 = vld [vmem:[%s5 + $0x28] sm:$0xff]
        %v2272 = vld [vmem:[%s5 + $0x30] sm:$0xff]
        %v2273 = vld [vmem:[%s5 + $0x38] sm:$0xff]
        %v2274 = vld [vmem:[%s5 + $0x40] sm:$0xff]
        %v2275 = vld [vmem:[%s5 + $0x48] sm:$0xff]
        %v2276 = vld [vmem:[%s5 + $0x50] sm:$0xff]
        %v2277 = vld [vmem:[%s5 + $0x58] sm:$0xff]
        %v2278 = vld [vmem:[%s5 + $0x60] sm:$0xff]
        %v2279 = vld [vmem:[%s5 + $0x68] sm:$0xff]
        %v2280 = vld [vmem:[%s5 + $0x70] sm:$0xff]
        %v2281 = vld [vmem:[%s5 + $0x78] sm:$0xff]
        %v2282 = vld [vmem:[%s6] sm:$0x1]
        %v2284 = vlaneseq
        %v2285 = vshrl.u32 %v2284, 7
        %v2286 = vsub.s32 0, %v2285
        %v2287 = vrot.slane %v2282, %v2286
        %2289 = vmatprep.subr.mxu0 0.0
        %2290 = vmatpush1.msra.mxu0 %v2266
        %2291 = vmatprep.subr.mxu0 0.0
        %2292 = vmatpush1.msra.mxu0 %v2267
        %2293 = vmatprep.subr.mxu0 0.0
        %2294 = vmatpush1.msra.mxu0 %v2268
        %2295 = vmatprep.subr.mxu0 0.0
        %2296 = vmatpush1.msra.mxu0 %v2269
        %2297 = vmatprep.subr.mxu0 0.0
        %2298 = vmatpush1.msra.mxu0 %v2270
        %2299 = vmatprep.subr.mxu0 0.0
        %2300 = vmatpush1.msra.mxu0 %v2271
        %2301 = vmatprep.subr.mxu0 0.0
        %2302 = vmatpush1.msra.mxu0 %v2272
        %2303 = vmatprep.subr.mxu0 0.0
        %2304 = vmatpush1.msra.mxu0 %v2273
        %2305 = vmatprep.subr.mxu0 0.0
        %2306 = vmatpush1.msra.mxu0 %v2274
        %2307 = vmatprep.subr.mxu0 0.0
        %2308 = vmatpush1.msra.mxu0 %v2275
        %2309 = vmatprep.subr.mxu0 0.0
        %2310 = vmatpush1.msra.mxu0 %v2276
        %2311 = vmatprep.subr.mxu0 0.0
        %2312 = vmatpush1.msra.mxu0 %v2277
        %2313 = vmatprep.subr.mxu0 0.0
        %2314 = vmatpush1.msra.mxu0 %v2278
        %2315 = vmatprep.subr.mxu0 0.0
        %2316 = vmatpush1.msra.mxu0 %v2279
        %2317 = vmatprep.subr.mxu0 0.0
        %2318 = vmatpush1.msra.mxu0 %v2280
        %2319 = vmatprep.subr.mxu0 0.0
        %2320 = vmatpush1.msra.mxu0 %v2281
        %2321 = vmatprep.subr.mxu0 0.0
        %2322 = vmatpush1.msra.mxu0 0.0
        %2323 = vmatprep.subr.mxu0 0.0
        %2324 = vmatpush1.msra.mxu0 0.0
        %2325 = vmatprep.subr.mxu0 0.0
        %2326 = vmatpush1.msra.mxu0 0.0
        %2327 = vmatprep.subr.mxu0 0.0
        %2328 = vmatpush1.msra.mxu0 0.0
        %2329 = vmatprep.subr.mxu0 0.0
        %2330 = vmatpush1.msra.mxu0 0.0
        %2331 = vmatprep.subr.mxu0 0.0
        %2332 = vmatpush1.msra.mxu0 0.0
        %2333 = vmatprep.subr.mxu0 0.0
        %2334 = vmatpush1.msra.mxu0 0.0
        %2335 = vmatprep.subr.mxu0 0.0
        %2336 = vmatpush1.msra.mxu0 0.0
        %2337 = vmatprep.subr.mxu0 0.0
        %2338 = vmatpush1.msra.mxu0 0.0
        %2339 = vmatprep.subr.mxu0 0.0
        %2340 = vmatpush1.msra.mxu0 0.0
        %2341 = vmatprep.subr.mxu0 0.0
        %2342 = vmatpush1.msra.mxu0 0.0
        %2343 = vmatprep.subr.mxu0 0.0
        %2344 = vmatpush1.msra.mxu0 0.0
        %2345 = vmatprep.subr.mxu0 0.0
        %2346 = vmatpush1.msra.mxu0 0.0
        %2347 = vmatprep.subr.mxu0 0.0
        %2348 = vmatpush1.msra.mxu0 0.0
        %2349 = vmatprep.subr.mxu0 0.0
        %2350 = vmatpush1.msra.mxu0 0.0
        %2351 = vmatprep.subr.mxu0 0.0
        %2352 = vmatpush1.msra.mxu0 0.0
        %2353 = vmatprep.mubr.f32.mxu0 0.0
        %2354 = vmatmul.mubr.f32.gmra.mrb[0].mxu0 %v2258
        %v2355 = vpop.f32.mrb[0].mxu0
        %v2356 = vadd.f32 %v2287, %v2355
        %v2357 = vpop.f32.mrb[0].mxu0
        %2358 = vmatprep.mubr.f32.mxu0 0.0
        %2359 = vmatmul.mubr.f32.gmra.mrb[0].mxu0 %v2259
        %v2360 = vpop.f32.mrb[0].mxu0
        %v2361 = vadd.f32 %v2287, %v2360
        %v2362 = vpop.f32.mrb[0].mxu0
        %2363 = vmatprep.mubr.f32.mxu0 0.0
        %2364 = vmatmul.mubr.f32.gmra.mrb[0].mxu0 %v2260
        %v2365 = vpop.f32.mrb[0].mxu0
        %v2366 = vadd.f32 %v2287, %v2365
        %v2367 = vpop.f32.mrb[0].mxu0
        %2368 = vmatprep.mubr.f32.mxu0 0.0
        %2369 = vmatmul.mubr.f32.gmra.mrb[0].mxu0 %v2261
        %v2370 = vpop.f32.mrb[0].mxu0
        %v2371 = vadd.f32 %v2287, %v2370
        %v2372 = vpop.f32.mrb[0].mxu0
        %2373 = vmatprep.mubr.f32.mxu0 0.0
        %2374 = vmatmul.mubr.f32.gmra.mrb[0].mxu0 %v2262
        %v2375 = vpop.f32.mrb[0].mxu0
        %v2376 = vadd.f32 %v2287, %v2375
        %v2377 = vpop.f32.mrb[0].mxu0
        %2378 = vmatprep.mubr.f32.mxu0 0.0
        %2379 = vmatmul.mubr.f32.gmra.mrb[0].mxu0 %v2263
        %v2380 = vpop.f32.mrb[0].mxu0
        %v2381 = vadd.f32 %v2287, %v2380
        %v2382 = vpop.f32.mrb[0].mxu0
        %2383 = vmatprep.mubr.f32.mxu0 0.0
        %2384 = vmatmul.mubr.f32.gmra.mrb[0].mxu0 %v2264
        %v2385 = vpop.f32.mrb[0].mxu0
        %v2386 = vadd.f32 %v2287, %v2385
        %v2387 = vpop.f32.mrb[0].mxu0
        %2388 = vmatprep.mubr.f32.mxu0 0.0
        %2389 = vmatmul.mubr.f32.gmra.mrb[0].mxu0 %v2265
        %v2390 = vpop.f32.mrb[0].mxu0
        %v2391 = vadd.f32 %v2287, %v2390
        %v2392 = vpop.f32.mrb[0].mxu0
        %2393 = vdwg.mxu0
        %2394 = vst.msk [vmem:[%s289] sm:$0xff] %vm306, %v2356
        %2395 = vst.msk [vmem:[%s289 + $0x8] sm:$0xff] %vm306, %v2361
        %2396 = vst.msk [vmem:[%s289 + $0x10] sm:$0xff] %vm306, %v2366
        %2397 = vst.msk [vmem:[%s289 + $0x18] sm:$0xff] %vm306, %v2371
        %2398 = vst.msk [vmem:[%s289 + $0x20] sm:$0xff] %vm306, %v2376
        %2399 = vst.msk [vmem:[%s289 + $0x28] sm:$0xff] %vm306, %v2381
        %2400 = vst.msk [vmem:[%s289 + $0x30] sm:$0xff] %vm306, %v2386
        %2401 = vst.msk [vmem:[%s289 + $0x38] sm:$0xff] %vm306, %v2391
        %s2402 = sand.u32 %s182, 1
        %s2403 = scalar_lea.sflag [#allocation4], %s2402
        %s2404 = sand.u32 %s182, 1
        %s2405 = smul.addr %s2404, 64
        %s2406 = scalar_lea.vmem [#allocation5], %s2405
        // Predicated region
        $region53: #{tpu_custom_call.1} parent=47 // pred_check
          %p2407 = pneg %p192
        $region54: #{tpu_custom_call.1} parent=47 // pred_check_branch
          %2409 = sbr.rel (%p2407) target = $region56
        $region55: #{tpu_custom_call.1} parent=47 // pred_region
          %s2410 = smul.u32 4, %s22
          %s2412 = ssub.s32 1024, 1024
          %2413 = vsyncadd %s2403, %s2412
          %s2414 = smul.addr %s2410, 2
          %s2415 = smul.addr %s2414, 128
          %s2416 = scalar_lea.hbm %s7, %s2415
          %s2417 = sshll.u32 %s2406, 4
          %s2418 = int_to_ptr.vmem [resolvable:$true] %s2417
          %2423 = dma.vmem_to_hbm [thread:$0]  %s2418, 1024, %s2416, %s2403, 128, 128, 8
        $region56: #{tpu_custom_call.1} parent=47 // pred_fallthru
          _
      $region48: #{tpu_custom_call.1} parent=5 // pred_fallthru
        _
      %p2424 = scmp.le.s32.totalorder 2, %s17
      // Predicated region
      $region57: #{tpu_custom_call.1} parent=5 // pred_check
        %p2425 = pneg %p2424
      $region58: #{tpu_custom_call.1} parent=5 // pred_check_branch
        %2427 = sbr.rel (%p2425) target = $region60
      $region59: #{tpu_custom_call.1} parent=5 // pred_region
        %s2428 = ssub.s32 %s17, 2
        // Predicated region
        $region61: #{tpu_custom_call.1} parent=59 // pred_check
          %p2429 = pneg %p198
        $region62: #{tpu_custom_call.1} parent=59 // pred_check_branch
          %2431 = sbr.rel (%p2429) target = $region64
        $region63: #{tpu_custom_call.1} parent=59 // pred_region
          %s2432 = sand.u32 %s183, 1
          %s2433 = scalar_lea.sflag [#allocation4], %s2432
          %s2434 = sand.u32 %s183, 1
          %s2435 = smul.addr %s2434, 64
          %s2436 = scalar_lea.vmem [#allocation5], %s2435
          %2437 = dma.done %s2433, 1024
        $region64: #{tpu_custom_call.1} parent=59 // pred_fallthru
          _
      $region60: #{tpu_custom_call.1} parent=5 // pred_fallthru
        _
    $region6: #{tpu_custom_call.1} parent=1 // loop_footer
      %s21 = sadd.s32 1, %s17
    $region7: #{tpu_custom_call.1} parent=1 // loop_footer_branch
      %16 = sbr.rel target = $region3
    $region8: #{tpu_custom_call.1} parent=1 // loop_exit
      _
    %2438 = vsyncpa [#allocation3], 1
    %s2439 = scalar_lea.sflag [#allocation3], 1
    %2440 = vsyncpa %s2439, 1
    %2441 = vsyncpa [#allocation4], 1
    %s2442 = scalar_lea.sflag [#allocation4], 1
    %2443 = vsyncpa %s2442, 1

</llo_original>
